<compile_context>
chip_gen: v7x
topology: tpu7x:2x2x1
jax: 0.10.0
libtpu: 0.0.40
codegen_flags: <defaults>
</compile_context>

<pallas_src>
import functools

import jax
import jax.numpy as jnp
from jax.experimental import pallas as pl
from jax.experimental.pallas import tpu as pltpu


def _round_up(v: int, m: int) -> int:
    return (v + m - 1) // m * m


# ----------------------------- Fused Pallas kernel ---------------------------

def _fused_mlp_kernel(*refs, num_layers: int, has_classifier: bool):
    """One row-tile of the full MLP forward.

    Ref order: x, (w_i, b_i) * num_layers, w_sc, b_sc, [w_cls, b_cls],
               out, [logits].
    x and weights arrive as bf16 (pre-cast/padded in the wrapper); biases f32.
    """
    idx = 0
    x_ref = refs[idx]; idx += 1
    layer_refs = []
    for _ in range(num_layers):
        layer_refs.append((refs[idx], refs[idx + 1]))
        idx += 2
    wsc_ref, bsc_ref = refs[idx], refs[idx + 1]; idx += 2
    if has_classifier:
        wcls_ref, bcls_ref = refs[idx], refs[idx + 1]; idx += 2
    out_ref = refs[idx]; idx += 1
    logits_ref = refs[idx] if has_classifier else None

    x_bf = x_ref[...]            # already bf16: no per-tile cast, half the DMA bytes

    # Hidden stack: Linear + ReLU, all layers kept on-chip (no HBM round trips).
    h = x_bf
    y = None
    for li, (w_ref, b_ref) in enumerate(layer_refs):
        if li > 0:
            h = y.astype(jnp.bfloat16)           # bf16 operand for next MXU pass
        y = jnp.dot(h, w_ref[...], preferred_element_type=jnp.float32)
        y = jnp.maximum(y + b_ref[...], 0.0)     # bias add + ReLU in f32

    # Shortcut from the ORIGINAL input tile (already resident -> no extra HBM read).
    sc = jnp.dot(x_bf, wsc_ref[...], preferred_element_type=jnp.float32)
    out = y + sc + bsc_ref[...]
    out_bf = out.astype(out_ref.dtype)           # single cast, reused for classifier
    out_ref[...] = out_bf

    if has_classifier:
        logits = jnp.dot(out_bf, wcls_ref[...],
                         preferred_element_type=jnp.float32) + bcls_ref[...]
        logits_ref[...] = logits.astype(logits_ref.dtype)


# --------------------------------- Wrapper -----------------------------------

def mlp_forward(params, x, *, tile_n_target: int = 1024, out_dtype=jnp.bfloat16):
    """Fused MLP forward. Returns `out` or `(out, logits)` like the PyTorch module.

    Outputs are bf16 by default (halves HBM writeback); pass out_dtype=jnp.float32
    for full-precision stores.
    """
    layers = params["layers"]
    num_layers = len(layers)
    assert num_layers >= 1, "MLP requires at least one Linear layer"
    has_classifier = "classifier" in params

    n, d_in = x.shape
    hidden = layers[0][0].shape[1]

    # Lane-dense padded output feature widths (multiples of 128). The INPUT feature
    # axis is intentionally NOT padded: block dim == full array dim is legal, and it
    # avoids a widened extra HBM pass over x before the kernel.
    h_p = _round_up(hidden, 128)

    def pad2(a, rows, cols, dtype):
        a = a.astype(dtype)
        return jnp.pad(a, ((0, rows - a.shape[0]), (0, cols - a.shape[1])))

    # Zero-padded params (zero columns/rows keep padded features exactly zero).
    padded_layers = []
    w0, b0 = layers[0]
    padded_layers.append((pad2(w0, d_in, h_p, jnp.bfloat16),
                          pad2(b0, 1, h_p, jnp.float32)))
    for (w, b) in layers[1:]:
        padded_layers.append((pad2(w, h_p, h_p, jnp.bfloat16),
                              pad2(b, 1, h_p, jnp.float32)))
    wsc, bsc = params["shortcut"]
    wsc_p = pad2(wsc, d_in, h_p, jnp.bfloat16)
    bsc_p = pad2(bsc, 1, h_p, jnp.float32)
    c_p = 0
    if has_classifier:
        wcls, bcls = params["classifier"]
        n_classes = wcls.shape[1]
        c_p = _round_up(n_classes, 128)
        wcls_p = pad2(wcls, h_p, c_p, jnp.bfloat16)
        bcls_p = pad2(bcls, 1, c_p, jnp.float32)

    # Row tiling: bf16 rows -> 16-sublane alignment. Ensure >=2 grid steps whenever
    # N allows (v7x 2-TC sharding via "parallel"), otherwise one big tile; cap at
    # tile_n_target to keep double-buffered activation blocks small.
    n_pad16 = _round_up(max(n, 1), 16)
    if n_pad16 > 16:
        tile_n = min(tile_n_target, _round_up(pl.cdiv(n_pad16, 2), 16))
    else:
        tile_n = n_pad16
    n_pad = _round_up(n_pad16, tile_n)

    # x: bf16, rows padded only (feature axis untouched).
    x_p = jnp.pad(x.astype(jnp.bfloat16), ((0, n_pad - n), (0, 0)))

    grid = (n_pad // tile_n,)

    def row_block(width):
        return pl.BlockSpec((tile_n, width), lambda i: (i, 0))

    def resident(shape, pipeline_mode):
        # Constant block index across the grid -> DMA'd once, stays in VMEM.
        if pipeline_mode is None:
            return pl.BlockSpec(shape, lambda i: (0, 0))
        return pl.BlockSpec(shape, lambda i: (0, 0), pipeline_mode=pipeline_mode)

    # VMEM budget from the actual chip: ~96 MiB on 128 MiB parts (v5e/v6e),
    # ~48 MiB on v7x's 64 MiB/TC.
    try:
        vmem_cap = pltpu.get_tpu_info().vmem_capacity_bytes
    except Exception:
        vmem_cap = 64 * 1024 * 1024
    vmem_limit = min(int(vmem_cap * 3 // 4), 96 * 1024 * 1024)

    def build_and_run(single_buffer_residents):
        pm = pl.Buffered(1) if single_buffer_residents else None

        in_specs = [row_block(d_in)]
        call_inputs = [x_p]
        for (w, b) in padded_layers:
            in_specs += [resident(w.shape, pm), resident(b.shape, pm)]
            call_inputs += [w, b]
        in_specs += [resident(wsc_p.shape, pm), resident(bsc_p.shape, pm)]
        call_inputs += [wsc_p, bsc_p]
        if has_classifier:
            in_specs += [resident(wcls_p.shape, pm), resident(bcls_p.shape, pm)]
            call_inputs += [wcls_p, bcls_p]

        out_shapes = [jax.ShapeDtypeStruct((n_pad, h_p), out_dtype)]
        out_specs = [row_block(h_p)]
        if has_classifier:
            out_shapes.append(jax.ShapeDtypeStruct((n_pad, c_p), out_dtype))
            out_specs.append(row_block(c_p))

        kern = functools.partial(_fused_mlp_kernel,
                                 num_layers=num_layers,
                                 has_classifier=has_classifier)

        return pl.pallas_call(
            kern,
            out_shape=tuple(out_shapes),
            grid_spec=pltpu.PrefetchScalarGridSpec(
                num_scalar_prefetch=0,
                grid=grid,
                in_specs=in_specs,
                out_specs=tuple(out_specs),
            ),
            compiler_params=pltpu.CompilerParams(
                dimension_semantics=("parallel",),
                vmem_limit_bytes=vmem_limit,
            ),
        )(*call_inputs)

    try:
        results = jax.block_until_ready(build_and_run(single_buffer_residents=True))
    except Exception:
        # Fallback if this JAX build rejects pipeline_mode=pl.Buffered(1) on
        # constant-index resident blocks (pure VMEM-footprint optimization).
        results = build_and_run(single_buffer_residents=False)

    out = results[0][:n, :hidden]
    if has_classifier:
        logits = results[1][:n, :n_classes]
        return out, logits
    return out


# ------------------------------ Params / reference ---------------------------

def init_mlp_params(key, input_dim, hidden_dim, num_layers, n_classes=0):
    """Deterministic synthetic params. Weights stored as (in, out) = W.T."""
    params = {"layers": []}
    dims_in = [input_dim] + [hidden_dim] * (num_layers - 1)
    for din in dims_in:
        key, kw, kb = jax.random.split(key, 3)
        w = jax.random.normal(kw, (din, hidden_dim), jnp.float32) * 0.1
        b = jax.random.normal(kb, (1, hidden_dim), jnp.float32) * 0.01
        params["layers"].append((w, b))
    key, kw, kb = jax.random.split(key, 3)
    params["shortcut"] = (
        jax.random.normal(kw, (input_dim, hidden_dim), jnp.float32) * 0.1,
        jax.random.normal(kb, (1, hidden_dim), jnp.float32) * 0.01,
    )
    if n_classes != 0:
        key, kw, kb = jax.random.split(key, 3)
        params["classifier"] = (
            jax.random.normal(kw, (hidden_dim, n_classes), jnp.float32) * 0.1,
            jax.random.normal(kb, (1, n_classes), jnp.float32) * 0.01,
        )
    return params


def mlp_reference(params, x):
    h = x
    for (w, b) in params["layers"]:
        h = jnp.maximum(h @ w + b, 0.0)
    out = h + (x @ params["shortcut"][0] + params["shortcut"][1])
    if "classifier" in params:
        w_c, b_c = params["classifier"]
        return out, out @ w_c + b_c
    return out


# ----------------------------------- Main -------------------------------------

if __name__ == "__main__":
    key = jax.random.PRNGKey(0)

    N = 8            # batch of node/feature rows
    INPUT_DIM = 16
    HIDDEN_DIM = 32
    NUM_LAYERS = 3
    N_CLASSES = 4

    key, kx, kp = jax.random.split(key, 3)
    x = jax.random.normal(kx, (N, INPUT_DIM), jnp.float32)
    params = init_mlp_params(kp, INPUT_DIM, HIDDEN_DIM, NUM_LAYERS, N_CLASSES)

    out, logits = mlp_forward(params, x)
    out = jax.block_until_ready(out)
    logits = jax.block_until_ready(logits)

    ref_out, ref_logits = mlp_reference(params, x)
    assert out.shape == (N, HIDDEN_DIM)
    assert logits.shape == (N, N_CLASSES)
    # bf16 MXU operands / bf16 stores with f32 accumulation -> loosened tolerances
    # vs the pure-f32 reference (intentional deviation; out_dtype=jnp.float32 is
    # available if closer parity is needed).
    assert jnp.allclose(out.astype(jnp.float32), ref_out, atol=5e-2, rtol=5e-2)
    assert jnp.allclose(logits.astype(jnp.float32), ref_logits, atol=5e-2, rtol=5e-2)

    print("KERNEL_OK")
</pallas_src>

<mosaic_0001>
module attributes {stable_mosaic.version = 11 : i64} {
  func.func @_fused_mlp_kernel(%arg0: i32, %arg1: memref<16x16xbf16, #tpu.memory_space<vmem>>, %arg2: memref<16x128xbf16, #tpu.memory_space<vmem>>, %arg3: memref<1x128xf32, #tpu.memory_space<vmem>>, %arg4: memref<128x128xbf16, #tpu.memory_space<vmem>>, %arg5: memref<1x128xf32, #tpu.memory_space<vmem>>, %arg6: memref<128x128xbf16, #tpu.memory_space<vmem>>, %arg7: memref<1x128xf32, #tpu.memory_space<vmem>>, %arg8: memref<16x128xbf16, #tpu.memory_space<vmem>>, %arg9: memref<1x128xf32, #tpu.memory_space<vmem>>, %arg10: memref<128x128xbf16, #tpu.memory_space<vmem>>, %arg11: memref<1x128xf32, #tpu.memory_space<vmem>>, %arg12: memref<16x128xbf16, #tpu.memory_space<vmem>>, %arg13: memref<16x128xbf16, #tpu.memory_space<vmem>>) attributes {dimension_semantics = [#tpu.dimension_semantics<parallel>], iteration_bounds = array<i64: 1>, scalar_prefetch = 0 : i64, scratch_operands = 0 : i64, tpu.core_type = #tpu.core_type<tc>, window_params = [{transform_indices = @transform_0, window_bounds = array<i64: 16, 16>}, {pipeline_mode = #tpu.pipeline_mode<synchronous>, transform_indices = @transform_1, window_bounds = array<i64: 16, 128>}, {pipeline_mode = #tpu.pipeline_mode<synchronous>, transform_indices = @transform_2, window_bounds = array<i64: 1, 128>}, {pipeline_mode = #tpu.pipeline_mode<synchronous>, transform_indices = @transform_3, window_bounds = array<i64: 128, 128>}, {pipeline_mode = #tpu.pipeline_mode<synchronous>, transform_indices = @transform_4, window_bounds = array<i64: 1, 128>}, {pipeline_mode = #tpu.pipeline_mode<synchronous>, transform_indices = @transform_5, window_bounds = array<i64: 128, 128>}, {pipeline_mode = #tpu.pipeline_mode<synchronous>, transform_indices = @transform_6, window_bounds = array<i64: 1, 128>}, {pipeline_mode = #tpu.pipeline_mode<synchronous>, transform_indices = @transform_7, window_bounds = array<i64: 16, 128>}, {pipeline_mode = #tpu.pipeline_mode<synchronous>, transform_indices = @transform_8, window_bounds = array<i64: 1, 128>}, {pipeline_mode = #tpu.pipeline_mode<synchronous>, transform_indices = @transform_9, window_bounds = array<i64: 128, 128>}, {pipeline_mode = #tpu.pipeline_mode<synchronous>, transform_indices = @transform_10, window_bounds = array<i64: 1, 128>}, {transform_indices = @transform_11, window_bounds = array<i64: 16, 128>}, {transform_indices = @transform_12, window_bounds = array<i64: 16, 128>}]} {
    %c0 = arith.constant 0 : index
    %c0_0 = arith.constant 0 : index
    %0 = vector.load %arg1[%c0, %c0_0] : memref<16x16xbf16, #tpu.memory_space<vmem>>, vector<16x16xbf16>
    %c0_1 = arith.constant 0 : index
    %c0_2 = arith.constant 0 : index
    %1 = vector.load %arg2[%c0_1, %c0_2] : memref<16x128xbf16, #tpu.memory_space<vmem>>, vector<16x128xbf16>
    %cst = arith.constant dense<0.000000e+00> : vector<16x128xf32>
    %2 = tpu.matmul %0, %1, %cst {dimension_numbers = #tpu.dot_dimension_numbers<[1], [0], [0], [1], [0, 0, 1, 1], [], []>} : vector<16x16xbf16>, vector<16x128xbf16>, vector<16x128xf32> -> vector<16x128xf32>
    %c0_3 = arith.constant 0 : index
    %c0_4 = arith.constant 0 : index
    %3 = vector.load %arg3[%c0_3, %c0_4] : memref<1x128xf32, #tpu.memory_space<vmem>>, vector<1x128xf32>
    %4 = vector.broadcast %3 : vector<1x128xf32> to vector<16x128xf32>
    %5 = arith.addf %2, %4 : vector<16x128xf32>
    %cst_5 = arith.constant 0.000000e+00 : f32
    %6 = vector.broadcast %cst_5 : f32 to vector<16x128xf32>
    %7 = arith.maximumf %5, %6 : vector<16x128xf32>
    %8 = arith.truncf %7 : vector<16x128xf32> to vector<16x128xbf16>
    %c0_6 = arith.constant 0 : index
    %c0_7 = arith.constant 0 : index
    %9 = vector.load %arg4[%c0_6, %c0_7] : memref<128x128xbf16, #tpu.memory_space<vmem>>, vector<128x128xbf16>
    %cst_8 = arith.constant dense<0.000000e+00> : vector<16x128xf32>
    %10 = tpu.matmul %8, %9, %cst_8 {dimension_numbers = #tpu.dot_dimension_numbers<[1], [0], [0], [1], [0, 0, 1, 1], [], []>} : vector<16x128xbf16>, vector<128x128xbf16>, vector<16x128xf32> -> vector<16x128xf32>
    %c0_9 = arith.constant 0 : index
    %c0_10 = arith.constant 0 : index
    %11 = vector.load %arg5[%c0_9, %c0_10] : memref<1x128xf32, #tpu.memory_space<vmem>>, vector<1x128xf32>
    %12 = vector.broadcast %11 : vector<1x128xf32> to vector<16x128xf32>
    %13 = arith.addf %10, %12 : vector<16x128xf32>
    %cst_11 = arith.constant 0.000000e+00 : f32
    %14 = vector.broadcast %cst_11 : f32 to vector<16x128xf32>
    %15 = arith.maximumf %13, %14 : vector<16x128xf32>
    %16 = arith.truncf %15 : vector<16x128xf32> to vector<16x128xbf16>
    %c0_12 = arith.constant 0 : index
    %c0_13 = arith.constant 0 : index
    %17 = vector.load %arg6[%c0_12, %c0_13] : memref<128x128xbf16, #tpu.memory_space<vmem>>, vector<128x128xbf16>
    %cst_14 = arith.constant dense<0.000000e+00> : vector<16x128xf32>
    %18 = tpu.matmul %16, %17, %cst_14 {dimension_numbers = #tpu.dot_dimension_numbers<[1], [0], [0], [1], [0, 0, 1, 1], [], []>} : vector<16x128xbf16>, vector<128x128xbf16>, vector<16x128xf32> -> vector<16x128xf32>
    %c0_15 = arith.constant 0 : index
    %c0_16 = arith.constant 0 : index
    %19 = vector.load %arg7[%c0_15, %c0_16] : memref<1x128xf32, #tpu.memory_space<vmem>>, vector<1x128xf32>
    %20 = vector.broadcast %19 : vector<1x128xf32> to vector<16x128xf32>
    %21 = arith.addf %18, %20 : vector<16x128xf32>
    %cst_17 = arith.constant 0.000000e+00 : f32
    %22 = vector.broadcast %cst_17 : f32 to vector<16x128xf32>
    %23 = arith.maximumf %21, %22 : vector<16x128xf32>
    %c0_18 = arith.constant 0 : index
    %c0_19 = arith.constant 0 : index
    %24 = vector.load %arg8[%c0_18, %c0_19] : memref<16x128xbf16, #tpu.memory_space<vmem>>, vector<16x128xbf16>
    %cst_20 = arith.constant dense<0.000000e+00> : vector<16x128xf32>
    %25 = tpu.matmul %0, %24, %cst_20 {dimension_numbers = #tpu.dot_dimension_numbers<[1], [0], [0], [1], [0, 0, 1, 1], [], []>} : vector<16x16xbf16>, vector<16x128xbf16>, vector<16x128xf32> -> vector<16x128xf32>
    %26 = arith.addf %23, %25 : vector<16x128xf32>
    %c0_21 = arith.constant 0 : index
    %c0_22 = arith.constant 0 : index
    %27 = vector.load %arg9[%c0_21, %c0_22] : memref<1x128xf32, #tpu.memory_space<vmem>>, vector<1x128xf32>
    %28 = vector.broadcast %27 : vector<1x128xf32> to vector<16x128xf32>
    %29 = arith.addf %26, %28 : vector<16x128xf32>
    %30 = arith.truncf %29 : vector<16x128xf32> to vector<16x128xbf16>
    %c0_23 = arith.constant 0 : index
    %c0_24 = arith.constant 0 : index
    %31 = vector.load %arg12[%c0_23, %c0_24] : memref<16x128xbf16, #tpu.memory_space<vmem>>, vector<16x128xbf16>
    tpu.vector_store %arg12[%c0_23, %c0_24], %30 {strides = array<i32>} : memref<16x128xbf16, #tpu.memory_space<vmem>>, vector<16x128xbf16>,
    %c0_25 = arith.constant 0 : index
    %c0_26 = arith.constant 0 : index
    %32 = vector.load %arg10[%c0_25, %c0_26] : memref<128x128xbf16, #tpu.memory_space<vmem>>, vector<128x128xbf16>
    %cst_27 = arith.constant dense<0.000000e+00> : vector<16x128xf32>
    %33 = tpu.matmul %30, %32, %cst_27 {dimension_numbers = #tpu.dot_dimension_numbers<[1], [0], [0], [1], [0, 0, 1, 1], [], []>} : vector<16x128xbf16>, vector<128x128xbf16>, vector<16x128xf32> -> vector<16x128xf32>
    %c0_28 = arith.constant 0 : index
    %c0_29 = arith.constant 0 : index
    %34 = vector.load %arg11[%c0_28, %c0_29] : memref<1x128xf32, #tpu.memory_space<vmem>>, vector<1x128xf32>
    %35 = vector.broadcast %34 : vector<1x128xf32> to vector<16x128xf32>
    %36 = arith.addf %33, %35 : vector<16x128xf32>
    %37 = arith.truncf %36 : vector<16x128xf32> to vector<16x128xbf16>
    %c0_30 = arith.constant 0 : index
    %c0_31 = arith.constant 0 : index
    %38 = vector.load %arg13[%c0_30, %c0_31] : memref<16x128xbf16, #tpu.memory_space<vmem>>, vector<16x128xbf16>
    tpu.vector_store %arg13[%c0_30, %c0_31], %37 {strides = array<i32>} : memref<16x128xbf16, #tpu.memory_space<vmem>>, vector<16x128xbf16>,
    return
  }
  func.func @transform_0(%arg0: i32) -> (i32, i32) {
    %c0_i32 = arith.constant 0 : i32
    %c0_i32_0 = arith.constant 0 : i32
    return %arg0, %c0_i32 : i32, i32
  }
  func.func @transform_1(%arg0: i32) -> (i32, i32) {
    %c0_i32 = arith.constant 0 : i32
    %c0_i32_0 = arith.constant 0 : i32
    %c0_i32_1 = arith.constant 0 : i32
    return %c0_i32, %c0_i32_0 : i32, i32
  }
  func.func @transform_2(%arg0: i32) -> (i32, i32) {
    %c0_i32 = arith.constant 0 : i32
    %c0_i32_0 = arith.constant 0 : i32
    %c0_i32_1 = arith.constant 0 : i32
    return %c0_i32, %c0_i32_0 : i32, i32
  }
  func.func @transform_3(%arg0: i32) -> (i32, i32) {
    %c0_i32 = arith.constant 0 : i32
    %c0_i32_0 = arith.constant 0 : i32
    %c0_i32_1 = arith.constant 0 : i32
    return %c0_i32, %c0_i32_0 : i32, i32
  }
  func.func @transform_4(%arg0: i32) -> (i32, i32) {
    %c0_i32 = arith.constant 0 : i32
    %c0_i32_0 = arith.constant 0 : i32
    %c0_i32_1 = arith.constant 0 : i32
    return %c0_i32, %c0_i32_0 : i32, i32
  }
  func.func @transform_5(%arg0: i32) -> (i32, i32) {
    %c0_i32 = arith.constant 0 : i32
    %c0_i32_0 = arith.constant 0 : i32
    %c0_i32_1 = arith.constant 0 : i32
    return %c0_i32, %c0_i32_0 : i32, i32
  }
  func.func @transform_6(%arg0: i32) -> (i32, i32) {
    %c0_i32 = arith.constant 0 : i32
    %c0_i32_0 = arith.constant 0 : i32
    %c0_i32_1 = arith.constant 0 : i32
    return %c0_i32, %c0_i32_0 : i32, i32
  }
  func.func @transform_7(%arg0: i32) -> (i32, i32) {
    %c0_i32 = arith.constant 0 : i32
    %c0_i32_0 = arith.constant 0 : i32
    %c0_i32_1 = arith.constant 0 : i32
    return %c0_i32, %c0_i32_0 : i32, i32
  }
  func.func @transform_8(%arg0: i32) -> (i32, i32) {
    %c0_i32 = arith.constant 0 : i32
    %c0_i32_0 = arith.constant 0 : i32
    %c0_i32_1 = arith.constant 0 : i32
    return %c0_i32, %c0_i32_0 : i32, i32
  }
  func.func @transform_9(%arg0: i32) -> (i32, i32) {
    %c0_i32 = arith.constant 0 : i32
    %c0_i32_0 = arith.constant 0 : i32
    %c0_i32_1 = arith.constant 0 : i32
    return %c0_i32, %c0_i32_0 : i32, i32
  }
  func.func @transform_10(%arg0: i32) -> (i32, i32) {
    %c0_i32 = arith.constant 0 : i32
    %c0_i32_0 = arith.constant 0 : i32
    %c0_i32_1 = arith.constant 0 : i32
    return %c0_i32, %c0_i32_0 : i32, i32
  }
  func.func @transform_11(%arg0: i32) -> (i32, i32) {
    %c0_i32 = arith.constant 0 : i32
    %c0_i32_0 = arith.constant 0 : i32
    return %arg0, %c0_i32 : i32, i32
  }
  func.func @transform_12(%arg0: i32) -> (i32, i32) {
    %c0_i32 = arith.constant 0 : i32
    %c0_i32_0 = arith.constant 0 : i32
    return %arg0, %c0_i32 : i32, i32
  }
}

module attributes {stable_mosaic.version = 11 : i64} {
  func.func @_fused_mlp_kernel(%arg0: i32, %arg1: memref<16x16xbf16, #tpu.memory_space<vmem>>, %arg2: memref<16x128xbf16, #tpu.memory_space<vmem>>, %arg3: memref<1x128xf32, #tpu.memory_space<vmem>>, %arg4: memref<128x128xbf16, #tpu.memory_space<vmem>>, %arg5: memref<1x128xf32, #tpu.memory_space<vmem>>, %arg6: memref<128x128xbf16, #tpu.memory_space<vmem>>, %arg7: memref<1x128xf32, #tpu.memory_space<vmem>>, %arg8: memref<16x128xbf16, #tpu.memory_space<vmem>>, %arg9: memref<1x128xf32, #tpu.memory_space<vmem>>, %arg10: memref<128x128xbf16, #tpu.memory_space<vmem>>, %arg11: memref<1x128xf32, #tpu.memory_space<vmem>>, %arg12: memref<16x128xbf16, #tpu.memory_space<vmem>>, %arg13: memref<16x128xbf16, #tpu.memory_space<vmem>>) attributes {dimension_semantics = [#tpu.dimension_semantics<parallel>], iteration_bounds = array<i64: 1>, scalar_prefetch = 0 : i64, scratch_operands = 0 : i64, tpu.core_type = #tpu.core_type<tc>, window_params = [{transform_indices = @transform_0, window_bounds = array<i64: 16, 16>}, {pipeline_mode = #tpu.pipeline_mode<synchronous>, transform_indices = @transform_1, window_bounds = array<i64: 16, 128>}, {pipeline_mode = #tpu.pipeline_mode<synchronous>, transform_indices = @transform_2, window_bounds = array<i64: 1, 128>}, {pipeline_mode = #tpu.pipeline_mode<synchronous>, transform_indices = @transform_3, window_bounds = array<i64: 128, 128>}, {pipeline_mode = #tpu.pipeline_mode<synchronous>, transform_indices = @transform_4, window_bounds = array<i64: 1, 128>}, {pipeline_mode = #tpu.pipeline_mode<synchronous>, transform_indices = @transform_5, window_bounds = array<i64: 128, 128>}, {pipeline_mode = #tpu.pipeline_mode<synchronous>, transform_indices = @transform_6, window_bounds = array<i64: 1, 128>}, {pipeline_mode = #tpu.pipeline_mode<synchronous>, transform_indices = @transform_7, window_bounds = array<i64: 16, 128>}, {pipeline_mode = #tpu.pipeline_mode<synchronous>, transform_indices = @transform_8, window_bounds = array<i64: 1, 128>}, {pipeline_mode = #tpu.pipeline_mode<synchronous>, transform_indices = @transform_9, window_bounds = array<i64: 128, 128>}, {pipeline_mode = #tpu.pipeline_mode<synchronous>, transform_indices = @transform_10, window_bounds = array<i64: 1, 128>}, {transform_indices = @transform_11, window_bounds = array<i64: 16, 128>}, {transform_indices = @transform_12, window_bounds = array<i64: 16, 128>}]} {
    %c0 = arith.constant 0 : index
    %c0_0 = arith.constant 0 : index
    %0 = vector.load %arg1[%c0, %c0_0] : memref<16x16xbf16, #tpu.memory_space<vmem>>, vector<16x16xbf16>
    %c0_1 = arith.constant 0 : index
    %c0_2 = arith.constant 0 : index
    %1 = vector.load %arg2[%c0_1, %c0_2] : memref<16x128xbf16, #tpu.memory_space<vmem>>, vector<16x128xbf16>
    %cst = arith.constant dense<0.000000e+00> : vector<16x128xf32>
    %2 = tpu.matmul %0, %1, %cst {dimension_numbers = #tpu.dot_dimension_numbers<[1], [0], [0], [1], [0, 0, 1, 1], [], []>} : vector<16x16xbf16>, vector<16x128xbf16>, vector<16x128xf32> -> vector<16x128xf32>
    %c0_3 = arith.constant 0 : index
    %c0_4 = arith.constant 0 : index
    %3 = vector.load %arg3[%c0_3, %c0_4] : memref<1x128xf32, #tpu.memory_space<vmem>>, vector<1x128xf32>
    %4 = vector.broadcast %3 : vector<1x128xf32> to vector<16x128xf32>
    %5 = arith.addf %2, %4 : vector<16x128xf32>
    %cst_5 = arith.constant 0.000000e+00 : f32
    %6 = vector.broadcast %cst_5 : f32 to vector<16x128xf32>
    %7 = arith.maximumf %5, %6 : vector<16x128xf32>
    %8 = arith.truncf %7 : vector<16x128xf32> to vector<16x128xbf16>
    %c0_6 = arith.constant 0 : index
    %c0_7 = arith.constant 0 : index
    %9 = vector.load %arg4[%c0_6, %c0_7] : memref<128x128xbf16, #tpu.memory_space<vmem>>, vector<128x128xbf16>
    %cst_8 = arith.constant dense<0.000000e+00> : vector<16x128xf32>
    %10 = tpu.matmul %8, %9, %cst_8 {dimension_numbers = #tpu.dot_dimension_numbers<[1], [0], [0], [1], [0, 0, 1, 1], [], []>} : vector<16x128xbf16>, vector<128x128xbf16>, vector<16x128xf32> -> vector<16x128xf32>
    %c0_9 = arith.constant 0 : index
    %c0_10 = arith.constant 0 : index
    %11 = vector.load %arg5[%c0_9, %c0_10] : memref<1x128xf32, #tpu.memory_space<vmem>>, vector<1x128xf32>
    %12 = vector.broadcast %11 : vector<1x128xf32> to vector<16x128xf32>
    %13 = arith.addf %10, %12 : vector<16x128xf32>
    %cst_11 = arith.constant 0.000000e+00 : f32
    %14 = vector.broadcast %cst_11 : f32 to vector<16x128xf32>
    %15 = arith.maximumf %13, %14 : vector<16x128xf32>
    %16 = arith.truncf %15 : vector<16x128xf32> to vector<16x128xbf16>
    %c0_12 = arith.constant 0 : index
    %c0_13 = arith.constant 0 : index
    %17 = vector.load %arg6[%c0_12, %c0_13] : memref<128x128xbf16, #tpu.memory_space<vmem>>, vector<128x128xbf16>
    %cst_14 = arith.constant dense<0.000000e+00> : vector<16x128xf32>
    %18 = tpu.matmul %16, %17, %cst_14 {dimension_numbers = #tpu.dot_dimension_numbers<[1], [0], [0], [1], [0, 0, 1, 1], [], []>} : vector<16x128xbf16>, vector<128x128xbf16>, vector<16x128xf32> -> vector<16x128xf32>
    %c0_15 = arith.constant 0 : index
    %c0_16 = arith.constant 0 : index
    %19 = vector.load %arg7[%c0_15, %c0_16] : memref<1x128xf32, #tpu.memory_space<vmem>>, vector<1x128xf32>
    %20 = vector.broadcast %19 : vector<1x128xf32> to vector<16x128xf32>
    %21 = arith.addf %18, %20 : vector<16x128xf32>
    %cst_17 = arith.constant 0.000000e+00 : f32
    %22 = vector.broadcast %cst_17 : f32 to vector<16x128xf32>
    %23 = arith.maximumf %21, %22 : vector<16x128xf32>
    %c0_18 = arith.constant 0 : index
    %c0_19 = arith.constant 0 : index
    %24 = vector.load %arg8[%c0_18, %c0_19] : memref<16x128xbf16, #tpu.memory_space<vmem>>, vector<16x128xbf16>
    %cst_20 = arith.constant dense<0.000000e+00> : vector<16x128xf32>
    %25 = tpu.matmul %0, %24, %cst_20 {dimension_numbers = #tpu.dot_dimension_numbers<[1], [0], [0], [1], [0, 0, 1, 1], [], []>} : vector<16x16xbf16>, vector<16x128xbf16>, vector<16x128xf32> -> vector<16x128xf32>
    %26 = arith.addf %23, %25 : vector<16x128xf32>
    %c0_21 = arith.constant 0 : index
    %c0_22 = arith.constant 0 : index
    %27 = vector.load %arg9[%c0_21, %c0_22] : memref<1x128xf32, #tpu.memory_space<vmem>>, vector<1x128xf32>
    %28 = vector.broadcast %27 : vector<1x128xf32> to vector<16x128xf32>
    %29 = arith.addf %26, %28 : vector<16x128xf32>
    %30 = arith.truncf %29 : vector<16x128xf32> to vector<16x128xbf16>
    %c0_23 = arith.constant 0 : index
    %c0_24 = arith.constant 0 : index
    %31 = vector.load %arg12[%c0_23, %c0_24] : memref<16x128xbf16, #tpu.memory_space<vmem>>, vector<16x128xbf16>
    tpu.vector_store %arg12[%c0_23, %c0_24], %30 {strides = array<i32>} : memref<16x128xbf16, #tpu.memory_space<vmem>>, vector<16x128xbf16>,
    %c0_25 = arith.constant 0 : index
    %c0_26 = arith.constant 0 : index
    %32 = vector.load %arg10[%c0_25, %c0_26] : memref<128x128xbf16, #tpu.memory_space<vmem>>, vector<128x128xbf16>
    %cst_27 = arith.constant dense<0.000000e+00> : vector<16x128xf32>
    %33 = tpu.matmul %30, %32, %cst_27 {dimension_numbers = #tpu.dot_dimension_numbers<[1], [0], [0], [1], [0, 0, 1, 1], [], []>} : vector<16x128xbf16>, vector<128x128xbf16>, vector<16x128xf32> -> vector<16x128xf32>
    %c0_28 = arith.constant 0 : index
    %c0_29 = arith.constant 0 : index
    %34 = vector.load %arg11[%c0_28, %c0_29] : memref<1x128xf32, #tpu.memory_space<vmem>>, vector<1x128xf32>
    %35 = vector.broadcast %34 : vector<1x128xf32> to vector<16x128xf32>
    %36 = arith.addf %33, %35 : vector<16x128xf32>
    %37 = arith.truncf %36 : vector<16x128xf32> to vector<16x128xbf16>
    %c0_30 = arith.constant 0 : index
    %c0_31 = arith.constant 0 : index
    %38 = vector.load %arg13[%c0_30, %c0_31] : memref<16x128xbf16, #tpu.memory_space<vmem>>, vector<16x128xbf16>
    tpu.vector_store %arg13[%c0_30, %c0_31], %37 {strides = array<i32>} : memref<16x128xbf16, #tpu.memory_space<vmem>>, vector<16x128xbf16>,
    return
  }
  func.func @transform_0(%arg0: i32) -> (i32, i32) {
    %c0_i32 = arith.constant 0 : i32
    %c0_i32_0 = arith.constant 0 : i32
    return %arg0, %c0_i32 : i32, i32
  }
  func.func @transform_1(%arg0: i32) -> (i32, i32) {
    %c0_i32 = arith.constant 0 : i32
    %c0_i32_0 = arith.constant 0 : i32
    %c0_i32_1 = arith.constant 0 : i32
    return %c0_i32, %c0_i32_0 : i32, i32
  }
  func.func @transform_2(%arg0: i32) -> (i32, i32) {
    %c0_i32 = arith.constant 0 : i32
    %c0_i32_0 = arith.constant 0 : i32
    %c0_i32_1 = arith.constant 0 : i32
    return %c0_i32, %c0_i32_0 : i32, i32
  }
  func.func @transform_3(%arg0: i32) -> (i32, i32) {
    %c0_i32 = arith.constant 0 : i32
    %c0_i32_0 = arith.constant 0 : i32
    %c0_i32_1 = arith.constant 0 : i32
    return %c0_i32, %c0_i32_0 : i32, i32
  }
  func.func @transform_4(%arg0: i32) -> (i32, i32) {
    %c0_i32 = arith.constant 0 : i32
    %c0_i32_0 = arith.constant 0 : i32
    %c0_i32_1 = arith.constant 0 : i32
    return %c0_i32, %c0_i32_0 : i32, i32
  }
  func.func @transform_5(%arg0: i32) -> (i32, i32) {
    %c0_i32 = arith.constant 0 : i32
    %c0_i32_0 = arith.constant 0 : i32
    %c0_i32_1 = arith.constant 0 : i32
    return %c0_i32, %c0_i32_0 : i32, i32
  }
  func.func @transform_6(%arg0: i32) -> (i32, i32) {
    %c0_i32 = arith.constant 0 : i32
    %c0_i32_0 = arith.constant 0 : i32
    %c0_i32_1 = arith.constant 0 : i32
    return %c0_i32, %c0_i32_0 : i32, i32
  }
  func.func @transform_7(%arg0: i32) -> (i32, i32) {
    %c0_i32 = arith.constant 0 : i32
    %c0_i32_0 = arith.constant 0 : i32
    %c0_i32_1 = arith.constant 0 : i32
    return %c0_i32, %c0_i32_0 : i32, i32
  }
  func.func @transform_8(%arg0: i32) -> (i32, i32) {
    %c0_i32 = arith.constant 0 : i32
    %c0_i32_0 = arith.constant 0 : i32
    %c0_i32_1 = arith.constant 0 : i32
    return %c0_i32, %c0_i32_0 : i32, i32
  }
  func.func @transform_9(%arg0: i32) -> (i32, i32) {
    %c0_i32 = arith.constant 0 : i32
    %c0_i32_0 = arith.constant 0 : i32
    %c0_i32_1 = arith.constant 0 : i32
    return %c0_i32, %c0_i32_0 : i32, i32
  }
  func.func @transform_10(%arg0: i32) -> (i32, i32) {
    %c0_i32 = arith.constant 0 : i32
    %c0_i32_0 = arith.constant 0 : i32
    %c0_i32_1 = arith.constant 0 : i32
    return %c0_i32, %c0_i32_0 : i32, i32
  }
  func.func @transform_11(%arg0: i32) -> (i32, i32) {
    %c0_i32 = arith.constant 0 : i32
    %c0_i32_0 = arith.constant 0 : i32
    return %arg0, %c0_i32 : i32, i32
  }
  func.func @transform_12(%arg0: i32) -> (i32, i32) {
    %c0_i32 = arith.constant 0 : i32
    %c0_i32_0 = arith.constant 0 : i32
    return %arg0, %c0_i32 : i32, i32
  }
}

</mosaic_0001>

<llo_original>
// kernel: tpu_custom_call.1
$region0: #{tpu_custom_call.1}
  #allocation0 [shape = 'u32[]', space=smem, size = 0x4, offset = 0x4, fixed_abs, tag = 'smem constant byte address 0x4 - core index']
  #allocation1 [shape = 'u32[144,128]{1,0:T(1,128)}', space=vmem, size = 0x12000, scoped, tag = 'internal scratch']
  %s0 = inlined_call_operand.hbm [shape: bf16[16,16], index: 0, kind: input, shape index: {}]
  %s1 = inlined_call_operand.hbm [shape: bf16[16,128], index: 1, kind: input, shape index: {}]
  %s2 = inlined_call_operand.vmem [shape: f32[1,128], index: 2, kind: input, shape index: {}]
  %s3 = inlined_call_operand.hbm [shape: bf16[128,128], index: 3, kind: input, shape index: {}]
  %s4 = inlined_call_operand.vmem [shape: f32[1,128], index: 4, kind: input, shape index: {}]
  %s5 = inlined_call_operand.hbm [shape: bf16[128,128], index: 5, kind: input, shape index: {}]
  %s6 = inlined_call_operand.vmem [shape: f32[1,128], index: 6, kind: input, shape index: {}]
  %s7 = inlined_call_operand.vmem [shape: bf16[16,128], index: 7, kind: input, shape index: {}]
  %s8 = inlined_call_operand.vmem [shape: f32[1,128], index: 8, kind: input, shape index: {}]
  %s9 = inlined_call_operand.hbm [shape: bf16[128,128], index: 9, kind: input, shape index: {}]
  %s10 = inlined_call_operand.vmem [shape: f32[1,128], index: 10, kind: input, shape index: {}]
  %s11 = inlined_call_operand.hbm [shape: bf16[16,128], index: 11, kind: output, shape index: {0}]
  %s12 = inlined_call_operand.hbm [shape: bf16[16,128], index: 12, kind: output, shape index: {1}]
  %13 = xla_tuple %s11, %s12
  %s14 = sld [smem:[#allocation0]]
  $region82: #{tpu_custom_call.1} parent=0
    _
  %s16 = ssub.s32 1, %s14
  %s17 = scalar_select 0, %s16, %s14
  $region1: #{tpu_custom_call.1} parent=0
    #allocation2 [shape = 'u8[4096]{0}', space=vmem, size = 0x1000, scoped, tag = 'input window, operand 0, single buffered']
    #allocation3 [shape = 's32[1]{0}', space=sflag, size = 0x4, scoped, tag = 'scoped memory for tpu_custom_call.1']
    #allocation4 [shape = 's32[1]{0}', space=sflag, size = 0x4, scoped, tag = 'scoped memory for tpu_custom_call.1']
    #allocation5 [shape = 'u8[4096]{0}', space=vmem, size = 0x1000, scoped, tag = 'input window, operand 1, single buffered']
    #allocation6 [shape = 's32[1]{0}', space=sflag, size = 0x4, scoped, tag = 'scoped memory for tpu_custom_call.1']
    #allocation7 [shape = 'u8[32768]{0}', space=vmem, size = 0x8000, scoped, tag = 'input window, operand 3, single buffered']
    #allocation8 [shape = 'u8[32768]{0}', space=vmem, size = 0x8000, scoped, tag = 'input window, operand 5, single buffered']
    #allocation9 [shape = 's32[1]{0}', space=sflag, size = 0x4, scoped, tag = 'scoped memory for tpu_custom_call.1']
    #allocation10 [shape = 'u8[32768]{0}', space=vmem, size = 0x8000, scoped, tag = 'input window, operand 9, single buffered']
    #allocation11 [shape = 'u8[4096]{0}', space=vmem, size = 0x1000, scoped, tag = 'output window, operand 0, single buffered']
    #allocation12 [shape = 'u8[4096]{0}', space=vmem, size = 0x1000, scoped, tag = 'output window, operand 1, single buffered']
    #allocation13 [shape = 's32[1]{0}', space=sflag, size = 0x4, scoped, tag = 'scoped memory for tpu_custom_call.1']
    %18 = vsyncpa [#allocation3], 0
    %19 = vsyncpa [#allocation6], 0
    %20 = vsyncpa [#allocation9], 0
    %21 = vsyncpa [#allocation4], 0
    %22 = vsyncpa [#allocation13], 0
    // Predicated region
    $region2: #{tpu_custom_call.1} parent=1 // pred_check
      _
    $region3: #{tpu_custom_call.1} parent=1 // pred_check_branch
      %24 = sbr.rel (0) target = $region5
    $region4: #{tpu_custom_call.1} parent=1 // pred_region
      %s26 = ssub.s32 128, 128
      %27 = vsyncadd [#allocation3], %s26
      %s28 = sshll.u32 [#allocation2], 4
      %s29 = int_to_ptr.vmem [resolvable:$true] %s28
      %34 = dma.hbm_to_vmem [thread:$0]  %s0, 128, %s29, [#allocation3], 64, 64, 4
    $region5: #{tpu_custom_call.1} parent=1 // pred_fallthru
      _
    // Predicated region
    $region6: #{tpu_custom_call.1} parent=1 // pred_check
      _
    $region7: #{tpu_custom_call.1} parent=1 // pred_check_branch
      %36 = sbr.rel (0) target = $region9
    $region8: #{tpu_custom_call.1} parent=1 // pred_region
      %s38 = ssub.s32 128, 128
      %39 = vsyncadd [#allocation6], %s38
      %s40 = sshll.u32 [#allocation5], 4
      %s41 = int_to_ptr.vmem [resolvable:$true] %s40
      %46 = dma.hbm_to_vmem [thread:$0]  %s1, 128, %s41, [#allocation6], 64, 64, 4
    $region9: #{tpu_custom_call.1} parent=1 // pred_fallthru
      _
    // Predicated region
    $region10: #{tpu_custom_call.1} parent=1 // pred_check
      _
    $region11: #{tpu_custom_call.1} parent=1 // pred_check_branch
      %48 = sbr.rel (0) target = $region13
    $region12: #{tpu_custom_call.1} parent=1 // pred_region
      _
    $region13: #{tpu_custom_call.1} parent=1 // pred_fallthru
      _
    // Predicated region
    $region14: #{tpu_custom_call.1} parent=1 // pred_check
      _
    $region15: #{tpu_custom_call.1} parent=1 // pred_check_branch
      %50 = sbr.rel (0) target = $region17
    $region16: #{tpu_custom_call.1} parent=1 // pred_region
      %s52 = ssub.s32 1024, 1024
      %53 = vsyncadd [#allocation6], %s52
      %s54 = sshll.u32 [#allocation7], 4
      %s55 = int_to_ptr.vmem [resolvable:$true] %s54
      %60 = dma.hbm_to_vmem [thread:$0]  %s3, 1024, %s55, [#allocation6], 64, 64, 4
    $region17: #{tpu_custom_call.1} parent=1 // pred_fallthru
      _
    // Predicated region
    $region18: #{tpu_custom_call.1} parent=1 // pred_check
      _
    $region19: #{tpu_custom_call.1} parent=1 // pred_check_branch
      %62 = sbr.rel (0) target = $region21
    $region20: #{tpu_custom_call.1} parent=1 // pred_region
      _
    $region21: #{tpu_custom_call.1} parent=1 // pred_fallthru
      _
    // Predicated region
    $region22: #{tpu_custom_call.1} parent=1 // pred_check
      _
    $region23: #{tpu_custom_call.1} parent=1 // pred_check_branch
      %64 = sbr.rel (0) target = $region25
    $region24: #{tpu_custom_call.1} parent=1 // pred_region
      %s66 = ssub.s32 1024, 1024
      %67 = vsyncadd [#allocation9], %s66
      %s68 = sshll.u32 [#allocation8], 4
      %s69 = int_to_ptr.vmem [resolvable:$true] %s68
      %74 = dma.hbm_to_vmem [thread:$0]  %s5, 1024, %s69, [#allocation9], 64, 64, 4
    $region25: #{tpu_custom_call.1} parent=1 // pred_fallthru
      _
    // Predicated region
    $region26: #{tpu_custom_call.1} parent=1 // pred_check
      _
    $region27: #{tpu_custom_call.1} parent=1 // pred_check_branch
      %76 = sbr.rel (0) target = $region29
    $region28: #{tpu_custom_call.1} parent=1 // pred_region
      _
    $region29: #{tpu_custom_call.1} parent=1 // pred_fallthru
      _
    // Predicated region
    $region30: #{tpu_custom_call.1} parent=1 // pred_check
      _
    $region31: #{tpu_custom_call.1} parent=1 // pred_check_branch
      %78 = sbr.rel (0) target = $region33
    $region32: #{tpu_custom_call.1} parent=1 // pred_region
      _
    $region33: #{tpu_custom_call.1} parent=1 // pred_fallthru
      _
    // Predicated region
    $region34: #{tpu_custom_call.1} parent=1 // pred_check
      _
    $region35: #{tpu_custom_call.1} parent=1 // pred_check_branch
      %80 = sbr.rel (0) target = $region37
    $region36: #{tpu_custom_call.1} parent=1 // pred_region
      _
    $region37: #{tpu_custom_call.1} parent=1 // pred_fallthru
      _
    // Predicated region
    $region38: #{tpu_custom_call.1} parent=1 // pred_check
      _
    $region39: #{tpu_custom_call.1} parent=1 // pred_check_branch
      %82 = sbr.rel (0) target = $region41
    $region40: #{tpu_custom_call.1} parent=1 // pred_region
      %s84 = ssub.s32 1024, 1024
      %85 = vsyncadd [#allocation9], %s84
      %s86 = sshll.u32 [#allocation10], 4
      %s87 = int_to_ptr.vmem [resolvable:$true] %s86
      %92 = dma.hbm_to_vmem [thread:$0]  %s9, 1024, %s87, [#allocation9], 64, 64, 4
    $region41: #{tpu_custom_call.1} parent=1 // pred_fallthru
      _
    // Predicated region
    $region42: #{tpu_custom_call.1} parent=1 // pred_check
      _
    $region43: #{tpu_custom_call.1} parent=1 // pred_check_branch
      %94 = sbr.rel (0) target = $region45
    $region44: #{tpu_custom_call.1} parent=1 // pred_region
      _
    $region45: #{tpu_custom_call.1} parent=1 // pred_fallthru
      _
    // Predicated region
    $region46: #{tpu_custom_call.1} parent=1 // pred_check
      _
    $region47: #{tpu_custom_call.1} parent=1 // pred_check_branch
      %96 = sbr.rel (0) target = $region49
    $region48: #{tpu_custom_call.1} parent=1 // pred_region
      %97 = dma.done [#allocation3], 128
    $region49: #{tpu_custom_call.1} parent=1 // pred_fallthru
      _
    // Predicated region
    $region50: #{tpu_custom_call.1} parent=1 // pred_check
      _
    $region51: #{tpu_custom_call.1} parent=1 // pred_check_branch
      %99 = sbr.rel (0) target = $region53
    $region52: #{tpu_custom_call.1} parent=1 // pred_region
      %100 = dma.done [#allocation6], 128
    $region53: #{tpu_custom_call.1} parent=1 // pred_fallthru
      _
    // Predicated region
    $region54: #{tpu_custom_call.1} parent=1 // pred_check
      _
    $region55: #{tpu_custom_call.1} parent=1 // pred_check_branch
      %102 = sbr.rel (0) target = $region57
    $region56: #{tpu_custom_call.1} parent=1 // pred_region
      %103 = dma.done [#allocation6], 1024
    $region57: #{tpu_custom_call.1} parent=1 // pred_fallthru
      _
    // Predicated region
    $region58: #{tpu_custom_call.1} parent=1 // pred_check
      _
    $region59: #{tpu_custom_call.1} parent=1 // pred_check_branch
      %105 = sbr.rel (0) target = $region61
    $region60: #{tpu_custom_call.1} parent=1 // pred_region
      %106 = dma.done [#allocation9], 1024
    $region61: #{tpu_custom_call.1} parent=1 // pred_fallthru
      _
    // Predicated region
    $region62: #{tpu_custom_call.1} parent=1 // pred_check
      _
    $region63: #{tpu_custom_call.1} parent=1 // pred_check_branch
      %108 = sbr.rel (0) target = $region65
    $region64: #{tpu_custom_call.1} parent=1 // pred_region
      %109 = dma.done [#allocation9], 1024
    $region65: #{tpu_custom_call.1} parent=1 // pred_fallthru
      _
    %v111 = vld [vmem:[#allocation2] sm:$0xf]
    %v112 = vld [vmem:[#allocation2 + $0x4] sm:$0xf]
    %v113 = vld [vmem:[#allocation5] sm:$0xf]
    %v114 = vld [vmem:[#allocation5 + $0x4] sm:$0xf]
    %v115 = vld [vmem:[%s2] sm:$0x1]
    %v117 = vlaneseq
    %v118 = vshrl.u32 %v117, 7
    %v119 = vsub.s32 0, %v118
    %v120 = vrot.slane %v115, %v119
    %v124 = vunpack.c.l.b16 %v111
    %v125 = vunpack.c.l.b16 %v112
    %v126 = vpack.c.b16 %v125, %v124
    %v129 = vunpack.c.l.b16 %v113
    %v130 = vunpack.c.l.b16 %v114
    %v131 = vpack.c.b16 %v130, %v129
    %vm133 = vcmask 130048
    %v135 = vsel %vm133, %v126, 0
    %137 = vmatprep.subr.bf16.mxu0 0
    %138 = vmatpush1.bf16.msra.mxu0 %v131
    %139 = vmatprep.subr.bf16.mxu0 0
    %140 = vmatpush1.bf16.msra.mxu0 0
    %141 = vmatprep.subr.bf16.mxu0 0
    %142 = vmatpush1.bf16.msra.mxu0 0
    %143 = vmatprep.subr.bf16.mxu0 0
    %144 = vmatpush1.bf16.msra.mxu0 0
    %145 = vmatprep.subr.bf16.mxu0 0
    %146 = vmatpush1.bf16.msra.mxu0 0
    %147 = vmatprep.subr.bf16.mxu0 0
    %148 = vmatpush1.bf16.msra.mxu0 0
    %149 = vmatprep.subr.bf16.mxu0 0
    %150 = vmatpush1.bf16.msra.mxu0 0
    %151 = vmatprep.subr.bf16.mxu0 0
    %152 = vmatpush1.bf16.msra.mxu0 0
    %153 = vmatprep.subr.bf16.mxu0 0
    %154 = vmatpush1.bf16.msra.mxu0 0
    %155 = vmatprep.subr.bf16.mxu0 0
    %156 = vmatpush1.bf16.msra.mxu0 0
    %157 = vmatprep.subr.bf16.mxu0 0
    %158 = vmatpush1.bf16.msra.mxu0 0
    %159 = vmatprep.subr.bf16.mxu0 0
    %160 = vmatpush1.bf16.msra.mxu0 0
    %161 = vmatprep.subr.bf16.mxu0 0
    %162 = vmatpush1.bf16.msra.mxu0 0
    %163 = vmatprep.subr.bf16.mxu0 0
    %164 = vmatpush1.bf16.msra.mxu0 0
    %165 = vmatprep.subr.bf16.mxu0 0
    %166 = vmatpush1.bf16.msra.mxu0 0
    %167 = vmatprep.subr.bf16.mxu0 0
    %168 = vmatpush1.bf16.msra.mxu0 0
    %169 = vmatprep.mubr.bf16.mxu0 0
    %170 = vmatmul.mubr.bf16.gmra.mrb[0].mxu0 %v135
    %v171 = vpop.f32.mrb[0].mxu0
    %v172 = vadd.f32 %v120, %v171
    %v173 = vpop.f32.mrb[0].mxu0
    %v174 = vpop.f32.mrb[0].mxu0
    %v175 = vadd.f32 %v120, %v174
    %v176 = vpop.f32.mrb[0].mxu0
    %177 = vdwg.mxu0
    %v178 = vmax.f32 %v172, 0.0
    %v179 = vmax.f32 %v175, 0.0
    %v180 = vpack.c.bf16 %v179, %v178
    %v181 = vld [vmem:[#allocation7] sm:$0xf]
    %v182 = vld [vmem:[#allocation7 + $0x4] sm:$0xf]
    %v183 = vld [vmem:[#allocation7 + $0x8] sm:$0xf]
    %v184 = vld [vmem:[#allocation7 + $0xc] sm:$0xf]
    %v185 = vld [vmem:[#allocation7 + $0x10] sm:$0xf]
    %v186 = vld [vmem:[#allocation7 + $0x14] sm:$0xf]
    %v187 = vld [vmem:[#allocation7 + $0x18] sm:$0xf]
    %v188 = vld [vmem:[#allocation7 + $0x1c] sm:$0xf]
    %v189 = vld [vmem:[#allocation7 + $0x20] sm:$0xf]
    %v190 = vld [vmem:[#allocation7 + $0x24] sm:$0xf]
    %v191 = vld [vmem:[#allocation7 + $0x28] sm:$0xf]
    %v192 = vld [vmem:[#allocation7 + $0x2c] sm:$0xf]
    %v193 = vld [vmem:[#allocation7 + $0x30] sm:$0xf]
    %v194 = vld [vmem:[#allocation7 + $0x34] sm:$0xf]
    %v195 = vld [vmem:[#allocation7 + $0x38] sm:$0xf]
    %v196 = vld [vmem:[#allocation7 + $0x3c] sm:$0xf]
    %v197 = vld [vmem:[%s4] sm:$0x1]
    %v199 = vlaneseq
    %v200 = vshrl.u32 %v199, 7
    %v201 = vsub.s32 0, %v200
    %v202 = vrot.slane %v197, %v201
    %v220 = vunpack.c.l.b16 %v181
    %v221 = vunpack.c.l.b16 %v182
    %v222 = vunpack.c.l.b16 %v183
    %v223 = vunpack.c.l.b16 %v184
    %v224 = vunpack.c.l.b16 %v185
    %v225 = vunpack.c.l.b16 %v186
    %v226 = vunpack.c.l.b16 %v187
    %v227 = vunpack.c.l.b16 %v188
    %v228 = vunpack.c.l.b16 %v189
    %v229 = vunpack.c.l.b16 %v190
    %v230 = vunpack.c.l.b16 %v191
    %v231 = vunpack.c.l.b16 %v192
    %v232 = vunpack.c.l.b16 %v193
    %v233 = vunpack.c.l.b16 %v194
    %v234 = vunpack.c.l.b16 %v195
    %v235 = vunpack.c.l.b16 %v196
    %v236 = vpack.c.b16 %v221, %v220
    %v237 = vpack.c.b16 %v223, %v222
    %v238 = vpack.c.b16 %v225, %v224
    %v239 = vpack.c.b16 %v227, %v226
    %v240 = vpack.c.b16 %v229, %v228
    %v241 = vpack.c.b16 %v231, %v230
    %v242 = vpack.c.b16 %v233, %v232
    %v243 = vpack.c.b16 %v235, %v234
    %252 = vmatprep.subr.bf16.mxu0 0
    %253 = vmatpush1.bf16.msra.mxu0 %v236
    %254 = vmatprep.subr.bf16.mxu0 0
    %255 = vmatpush1.bf16.msra.mxu0 %v237
    %256 = vmatprep.subr.bf16.mxu0 0
    %257 = vmatpush1.bf16.msra.mxu0 %v238
    %258 = vmatprep.subr.bf16.mxu0 0
    %259 = vmatpush1.bf16.msra.mxu0 %v239
    %260 = vmatprep.subr.bf16.mxu0 0
    %261 = vmatpush1.bf16.msra.mxu0 %v240
    %262 = vmatprep.subr.bf16.mxu0 0
    %263 = vmatpush1.bf16.msra.mxu0 %v241
    %264 = vmatprep.subr.bf16.mxu0 0
    %265 = vmatpush1.bf16.msra.mxu0 %v242
    %266 = vmatprep.subr.bf16.mxu0 0
    %267 = vmatpush1.bf16.msra.mxu0 %v243
    %268 = vmatprep.subr.bf16.mxu0 0
    %269 = vmatpush1.bf16.msra.mxu0 0
    %270 = vmatprep.subr.bf16.mxu0 0
    %271 = vmatpush1.bf16.msra.mxu0 0
    %272 = vmatprep.subr.bf16.mxu0 0
    %273 = vmatpush1.bf16.msra.mxu0 0
    %274 = vmatprep.subr.bf16.mxu0 0
    %275 = vmatpush1.bf16.msra.mxu0 0
    %276 = vmatprep.subr.bf16.mxu0 0
    %277 = vmatpush1.bf16.msra.mxu0 0
    %278 = vmatprep.subr.bf16.mxu0 0
    %279 = vmatpush1.bf16.msra.mxu0 0
    %280 = vmatprep.subr.bf16.mxu0 0
    %281 = vmatpush1.bf16.msra.mxu0 0
    %282 = vmatprep.subr.bf16.mxu0 0
    %283 = vmatpush1.bf16.msra.mxu0 0
    %284 = vmatprep.mubr.bf16.mxu0 0
    %285 = vmatmul.mubr.bf16.gmra.mrb[0].mxu0 %v180
    %v286 = vpop.f32.mrb[0].mxu0
    %v287 = vadd.f32 %v202, %v286
    %v288 = vpop.f32.mrb[0].mxu0
    %v289 = vpop.f32.mrb[0].mxu0
    %v290 = vadd.f32 %v202, %v289
    %v291 = vpop.f32.mrb[0].mxu0
    %292 = vdwg.mxu0
    %v293 = vmax.f32 %v287, 0.0
    %v294 = vmax.f32 %v290, 0.0
    %v295 = vpack.c.bf16 %v294, %v293
    %v296 = vld [vmem:[#allocation8] sm:$0xf]
    %v297 = vld [vmem:[#allocation8 + $0x4] sm:$0xf]
    %v298 = vld [vmem:[#allocation8 + $0x8] sm:$0xf]
    %v299 = vld [vmem:[#allocation8 + $0xc] sm:$0xf]
    %v300 = vld [vmem:[#allocation8 + $0x10] sm:$0xf]
    %v301 = vld [vmem:[#allocation8 + $0x14] sm:$0xf]
    %v302 = vld [vmem:[#allocation8 + $0x18] sm:$0xf]
    %v303 = vld [vmem:[#allocation8 + $0x1c] sm:$0xf]
    %v304 = vld [vmem:[#allocation8 + $0x20] sm:$0xf]
    %v305 = vld [vmem:[#allocation8 + $0x24] sm:$0xf]
    %v306 = vld [vmem:[#allocation8 + $0x28] sm:$0xf]
    %v307 = vld [vmem:[#allocation8 + $0x2c] sm:$0xf]
    %v308 = vld [vmem:[#allocation8 + $0x30] sm:$0xf]
    %v309 = vld [vmem:[#allocation8 + $0x34] sm:$0xf]
    %v310 = vld [vmem:[#allocation8 + $0x38] sm:$0xf]
    %v311 = vld [vmem:[#allocation8 + $0x3c] sm:$0xf]
    %v312 = vld [vmem:[%s6] sm:$0x1]
    %v314 = vlaneseq
    %v315 = vshrl.u32 %v314, 7
    %v316 = vsub.s32 0, %v315
    %v317 = vrot.slane %v312, %v316
    %v335 = vunpack.c.l.b16 %v296
    %v336 = vunpack.c.l.b16 %v297
    %v337 = vunpack.c.l.b16 %v298
    %v338 = vunpack.c.l.b16 %v299
    %v339 = vunpack.c.l.b16 %v300
    %v340 = vunpack.c.l.b16 %v301
    %v341 = vunpack.c.l.b16 %v302
    %v342 = vunpack.c.l.b16 %v303
    %v343 = vunpack.c.l.b16 %v304
    %v344 = vunpack.c.l.b16 %v305
    %v345 = vunpack.c.l.b16 %v306
    %v346 = vunpack.c.l.b16 %v307
    %v347 = vunpack.c.l.b16 %v308
    %v348 = vunpack.c.l.b16 %v309
    %v349 = vunpack.c.l.b16 %v310
    %v350 = vunpack.c.l.b16 %v311
    %v351 = vpack.c.b16 %v336, %v335
    %v352 = vpack.c.b16 %v338, %v337
    %v353 = vpack.c.b16 %v340, %v339
    %v354 = vpack.c.b16 %v342, %v341
    %v355 = vpack.c.b16 %v344, %v343
    %v356 = vpack.c.b16 %v346, %v345
    %v357 = vpack.c.b16 %v348, %v347
    %v358 = vpack.c.b16 %v350, %v349
    %367 = vmatprep.subr.bf16.mxu0 0
    %368 = vmatpush1.bf16.msra.mxu0 %v351
    %369 = vmatprep.subr.bf16.mxu0 0
    %370 = vmatpush1.bf16.msra.mxu0 %v352
    %371 = vmatprep.subr.bf16.mxu0 0
    %372 = vmatpush1.bf16.msra.mxu0 %v353
    %373 = vmatprep.subr.bf16.mxu0 0
    %374 = vmatpush1.bf16.msra.mxu0 %v354
    %375 = vmatprep.subr.bf16.mxu0 0
    %376 = vmatpush1.bf16.msra.mxu0 %v355
    %377 = vmatprep.subr.bf16.mxu0 0
    %378 = vmatpush1.bf16.msra.mxu0 %v356
    %379 = vmatprep.subr.bf16.mxu0 0
    %380 = vmatpush1.bf16.msra.mxu0 %v357
    %381 = vmatprep.subr.bf16.mxu0 0
    %382 = vmatpush1.bf16.msra.mxu0 %v358
    %383 = vmatprep.subr.bf16.mxu0 0
    %384 = vmatpush1.bf16.msra.mxu0 0
    %385 = vmatprep.subr.bf16.mxu0 0
    %386 = vmatpush1.bf16.msra.mxu0 0
    %387 = vmatprep.subr.bf16.mxu0 0
    %388 = vmatpush1.bf16.msra.mxu0 0
    %389 = vmatprep.subr.bf16.mxu0 0
    %390 = vmatpush1.bf16.msra.mxu0 0
    %391 = vmatprep.subr.bf16.mxu0 0
    %392 = vmatpush1.bf16.msra.mxu0 0
    %393 = vmatprep.subr.bf16.mxu0 0
    %394 = vmatpush1.bf16.msra.mxu0 0
    %395 = vmatprep.subr.bf16.mxu0 0
    %396 = vmatpush1.bf16.msra.mxu0 0
    %397 = vmatprep.subr.bf16.mxu0 0
    %398 = vmatpush1.bf16.msra.mxu0 0
    %399 = vmatprep.mubr.bf16.mxu0 0
    %400 = vmatmul.mubr.bf16.gmra.mrb[0].mxu0 %v295
    %v401 = vpop.f32.mrb[0].mxu0
    %v402 = vadd.f32 %v317, %v401
    %v403 = vpop.f32.mrb[0].mxu0
    %v404 = vpop.f32.mrb[0].mxu0
    %v405 = vadd.f32 %v317, %v404
    %v406 = vpop.f32.mrb[0].mxu0
    %407 = vdwg.mxu0
    %v408 = vmax.f32 %v402, 0.0
    %v409 = vmax.f32 %v405, 0.0
    %v410 = vld [vmem:[%s7] sm:$0xf]
    %v411 = vld [vmem:[%s7 + $0x4] sm:$0xf]
    %v414 = vunpack.c.l.b16 %v410
    %v415 = vunpack.c.l.b16 %v411
    %v416 = vpack.c.b16 %v415, %v414
    %418 = vmatprep.subr.bf16.mxu0 0
    %419 = vmatpush1.bf16.msra.mxu0 %v416
    %420 = vmatprep.subr.bf16.mxu0 0
    %421 = vmatpush1.bf16.msra.mxu0 0
    %422 = vmatprep.subr.bf16.mxu0 0
    %423 = vmatpush1.bf16.msra.mxu0 0
    %424 = vmatprep.subr.bf16.mxu0 0
    %425 = vmatpush1.bf16.msra.mxu0 0
    %426 = vmatprep.subr.bf16.mxu0 0
    %427 = vmatpush1.bf16.msra.mxu0 0
    %428 = vmatprep.subr.bf16.mxu0 0
    %429 = vmatpush1.bf16.msra.mxu0 0
    %430 = vmatprep.subr.bf16.mxu0 0
    %431 = vmatpush1.bf16.msra.mxu0 0
    %432 = vmatprep.subr.bf16.mxu0 0
    %433 = vmatpush1.bf16.msra.mxu0 0
    %434 = vmatprep.subr.bf16.mxu0 0
    %435 = vmatpush1.bf16.msra.mxu0 0
    %436 = vmatprep.subr.bf16.mxu0 0
    %437 = vmatpush1.bf16.msra.mxu0 0
    %438 = vmatprep.subr.bf16.mxu0 0
    %439 = vmatpush1.bf16.msra.mxu0 0
    %440 = vmatprep.subr.bf16.mxu0 0
    %441 = vmatpush1.bf16.msra.mxu0 0
    %442 = vmatprep.subr.bf16.mxu0 0
    %443 = vmatpush1.bf16.msra.mxu0 0
    %444 = vmatprep.subr.bf16.mxu0 0
    %445 = vmatpush1.bf16.msra.mxu0 0
    %446 = vmatprep.subr.bf16.mxu0 0
    %447 = vmatpush1.bf16.msra.mxu0 0
    %448 = vmatprep.subr.bf16.mxu0 0
    %449 = vmatpush1.bf16.msra.mxu0 0
    %450 = vmatprep.mubr.bf16.mxu0 0
    %451 = vmatmul.mubr.bf16.gmra.mrb[0].mxu0 %v135
    %v452 = vpop.f32.mrb[0].mxu0
    %v453 = vadd.f32 0.0, %v452
    %v454 = vpop.f32.mrb[0].mxu0
    %v455 = vpop.f32.mrb[0].mxu0
    %v456 = vadd.f32 0.0, %v455
    %v457 = vpop.f32.mrb[0].mxu0
    %458 = vdwg.mxu0
    %v459 = vadd.f32 %v408, %v453
    %v460 = vadd.f32 %v409, %v456
    %v461 = vld [vmem:[%s8] sm:$0x1]
    %v463 = vlaneseq
    %v464 = vshrl.u32 %v463, 7
    %v465 = vsub.s32 0, %v464
    %v466 = vrot.slane %v461, %v465
    %v468 = vadd.f32 %v459, %v466
    %v469 = vadd.f32 %v460, %v466
    %v470 = vpack.c.bf16 %v469, %v468
    %v472 = vunpack.c.l.b16 %v470
    %v473 = vunpack.c.h.b16 %v470
    %v474 = vpack.c.b16 %v472, %v472
    %v475 = vpack.c.b16 %v473, %v473
    %478 = vst [vmem:[#allocation11] sm:$0xf] %v474
    %479 = vst [vmem:[#allocation11 + $0x4] sm:$0xf] %v475
    %v480 = vld [vmem:[#allocation10] sm:$0xf]
    %v481 = vld [vmem:[#allocation10 + $0x4] sm:$0xf]
    %v482 = vld [vmem:[#allocation10 + $0x8] sm:$0xf]
    %v483 = vld [vmem:[#allocation10 + $0xc] sm:$0xf]
    %v484 = vld [vmem:[#allocation10 + $0x10] sm:$0xf]
    %v485 = vld [vmem:[#allocation10 + $0x14] sm:$0xf]
    %v486 = vld [vmem:[#allocation10 + $0x18] sm:$0xf]
    %v487 = vld [vmem:[#allocation10 + $0x1c] sm:$0xf]
    %v488 = vld [vmem:[#allocation10 + $0x20] sm:$0xf]
    %v489 = vld [vmem:[#allocation10 + $0x24] sm:$0xf]
    %v490 = vld [vmem:[#allocation10 + $0x28] sm:$0xf]
    %v491 = vld [vmem:[#allocation10 + $0x2c] sm:$0xf]
    %v492 = vld [vmem:[#allocation10 + $0x30] sm:$0xf]
    %v493 = vld [vmem:[#allocation10 + $0x34] sm:$0xf]
    %v494 = vld [vmem:[#allocation10 + $0x38] sm:$0xf]
    %v495 = vld [vmem:[#allocation10 + $0x3c] sm:$0xf]
    %v496 = vld [vmem:[%s10] sm:$0x1]
    %v498 = vlaneseq
    %v499 = vshrl.u32 %v498, 7
    %v500 = vsub.s32 0, %v499
    %v501 = vrot.slane %v496, %v500
    %v519 = vunpack.c.l.b16 %v480
    %v520 = vunpack.c.l.b16 %v481
    %v521 = vunpack.c.l.b16 %v482
    %v522 = vunpack.c.l.b16 %v483
    %v523 = vunpack.c.l.b16 %v484
    %v524 = vunpack.c.l.b16 %v485
    %v525 = vunpack.c.l.b16 %v486
    %v526 = vunpack.c.l.b16 %v487
    %v527 = vunpack.c.l.b16 %v488
    %v528 = vunpack.c.l.b16 %v489
    %v529 = vunpack.c.l.b16 %v490
    %v530 = vunpack.c.l.b16 %v491
    %v531 = vunpack.c.l.b16 %v492
    %v532 = vunpack.c.l.b16 %v493
    %v533 = vunpack.c.l.b16 %v494
    %v534 = vunpack.c.l.b16 %v495
    %v535 = vpack.c.b16 %v520, %v519
    %v536 = vpack.c.b16 %v522, %v521
    %v537 = vpack.c.b16 %v524, %v523
    %v538 = vpack.c.b16 %v526, %v525
    %v539 = vpack.c.b16 %v528, %v527
    %v540 = vpack.c.b16 %v530, %v529
    %v541 = vpack.c.b16 %v532, %v531
    %v542 = vpack.c.b16 %v534, %v533
    %551 = vmatprep.subr.bf16.mxu0 0
    %552 = vmatpush1.bf16.msra.mxu0 %v535
    %553 = vmatprep.subr.bf16.mxu0 0
    %554 = vmatpush1.bf16.msra.mxu0 %v536
    %555 = vmatprep.subr.bf16.mxu0 0
    %556 = vmatpush1.bf16.msra.mxu0 %v537
    %557 = vmatprep.subr.bf16.mxu0 0
    %558 = vmatpush1.bf16.msra.mxu0 %v538
    %559 = vmatprep.subr.bf16.mxu0 0
    %560 = vmatpush1.bf16.msra.mxu0 %v539
    %561 = vmatprep.subr.bf16.mxu0 0
    %562 = vmatpush1.bf16.msra.mxu0 %v540
    %563 = vmatprep.subr.bf16.mxu0 0
    %564 = vmatpush1.bf16.msra.mxu0 %v541
    %565 = vmatprep.subr.bf16.mxu0 0
    %566 = vmatpush1.bf16.msra.mxu0 %v542
    %567 = vmatprep.subr.bf16.mxu0 0
    %568 = vmatpush1.bf16.msra.mxu0 0
    %569 = vmatprep.subr.bf16.mxu0 0
    %570 = vmatpush1.bf16.msra.mxu0 0
    %571 = vmatprep.subr.bf16.mxu0 0
    %572 = vmatpush1.bf16.msra.mxu0 0
    %573 = vmatprep.subr.bf16.mxu0 0
    %574 = vmatpush1.bf16.msra.mxu0 0
    %575 = vmatprep.subr.bf16.mxu0 0
    %576 = vmatpush1.bf16.msra.mxu0 0
    %577 = vmatprep.subr.bf16.mxu0 0
    %578 = vmatpush1.bf16.msra.mxu0 0
    %579 = vmatprep.subr.bf16.mxu0 0
    %580 = vmatpush1.bf16.msra.mxu0 0
    %581 = vmatprep.subr.bf16.mxu0 0
    %582 = vmatpush1.bf16.msra.mxu0 0
    %583 = vmatprep.mubr.bf16.mxu0 0
    %584 = vmatmul.mubr.bf16.gmra.mrb[0].mxu0 %v470
    %v585 = vpop.f32.mrb[0].mxu0
    %v586 = vadd.f32 %v501, %v585
    %v587 = vpop.f32.mrb[0].mxu0
    %v588 = vpop.f32.mrb[0].mxu0
    %v589 = vadd.f32 %v501, %v588
    %v590 = vpop.f32.mrb[0].mxu0
    %591 = vdwg.mxu0
    %v592 = vpack.c.bf16 %v589, %v586
    %v594 = vunpack.c.l.b16 %v592
    %v595 = vunpack.c.h.b16 %v592
    %v596 = vpack.c.b16 %v594, %v594
    %v597 = vpack.c.b16 %v595, %v595
    %600 = vst [vmem:[#allocation12] sm:$0xf] %v596
    %601 = vst [vmem:[#allocation12 + $0x4] sm:$0xf] %v597
    // Predicated region
    $region66: #{tpu_custom_call.1} parent=1 // pred_check
      _
    $region67: #{tpu_custom_call.1} parent=1 // pred_check_branch
      %603 = sbr.rel (0) target = $region69
    $region68: #{tpu_custom_call.1} parent=1 // pred_region
      %s605 = ssub.s32 128, 128
      %606 = vsyncadd [#allocation4], %s605
      %s607 = sshll.u32 [#allocation11], 4
      %s608 = int_to_ptr.vmem [resolvable:$true] %s607
      %613 = dma.vmem_to_hbm [thread:$0]  %s608, 128, %s11, [#allocation4], 64, 64, 4
    $region69: #{tpu_custom_call.1} parent=1 // pred_fallthru
      _
    // Predicated region
    $region70: #{tpu_custom_call.1} parent=1 // pred_check
      _
    $region71: #{tpu_custom_call.1} parent=1 // pred_check_branch
      %615 = sbr.rel (0) target = $region73
    $region72: #{tpu_custom_call.1} parent=1 // pred_region
      %s617 = ssub.s32 128, 128
      %618 = vsyncadd [#allocation13], %s617
      %s619 = sshll.u32 [#allocation12], 4
      %s620 = int_to_ptr.vmem [resolvable:$true] %s619
      %625 = dma.vmem_to_hbm [thread:$0]  %s620, 128, %s12, [#allocation13], 64, 64, 4
    $region73: #{tpu_custom_call.1} parent=1 // pred_fallthru
      _
    // Predicated region
    $region74: #{tpu_custom_call.1} parent=1 // pred_check
      _
    $region75: #{tpu_custom_call.1} parent=1 // pred_check_branch
      %627 = sbr.rel (0) target = $region77
    $region76: #{tpu_custom_call.1} parent=1 // pred_region
      %628 = dma.done [#allocation4], 128
    $region77: #{tpu_custom_call.1} parent=1 // pred_fallthru
      _
    // Predicated region
    $region78: #{tpu_custom_call.1} parent=1 // pred_check
      _
    $region79: #{tpu_custom_call.1} parent=1 // pred_check_branch
      %630 = sbr.rel (0) target = $region81
    $region80: #{tpu_custom_call.1} parent=1 // pred_region
      %631 = dma.done [#allocation13], 128
    $region81: #{tpu_custom_call.1} parent=1 // pred_fallthru
      _
    %632 = vsyncpa [#allocation3], 1
    %633 = vsyncpa [#allocation6], 1
    %634 = vsyncpa [#allocation9], 1
    %635 = vsyncpa [#allocation4], 1
    %636 = vsyncpa [#allocation13], 1

// kernel: tpu_custom_call.1
$region0: #{tpu_custom_call.1}
  #allocation0 [shape = 'u32[]', space=smem, size = 0x4, offset = 0x4, fixed_abs, tag = 'smem constant byte address 0x4 - core index']
  #allocation1 [shape = 'u32[144,128]{1,0:T(1,128)}', space=vmem, size = 0x12000, scoped, tag = 'internal scratch']
  %s0 = inlined_call_operand.hbm [shape: bf16[16,16], index: 0, kind: input, shape index: {}]
  %s1 = inlined_call_operand.hbm [shape: bf16[16,128], index: 1, kind: input, shape index: {}]
  %s2 = inlined_call_operand.vmem [shape: f32[1,128], index: 2, kind: input, shape index: {}]
  %s3 = inlined_call_operand.hbm [shape: bf16[128,128], index: 3, kind: input, shape index: {}]
  %s4 = inlined_call_operand.vmem [shape: f32[1,128], index: 4, kind: input, shape index: {}]
  %s5 = inlined_call_operand.hbm [shape: bf16[128,128], index: 5, kind: input, shape index: {}]
  %s6 = inlined_call_operand.vmem [shape: f32[1,128], index: 6, kind: input, shape index: {}]
  %s7 = inlined_call_operand.vmem [shape: bf16[16,128], index: 7, kind: input, shape index: {}]
  %s8 = inlined_call_operand.vmem [shape: f32[1,128], index: 8, kind: input, shape index: {}]
  %s9 = inlined_call_operand.hbm [shape: bf16[128,128], index: 9, kind: input, shape index: {}]
  %s10 = inlined_call_operand.vmem [shape: f32[1,128], index: 10, kind: input, shape index: {}]
  %s11 = inlined_call_operand.hbm [shape: bf16[16,128], index: 11, kind: output, shape index: {0}]
  %s12 = inlined_call_operand.hbm [shape: bf16[16,128], index: 12, kind: output, shape index: {1}]
  %13 = xla_tuple %s11, %s12
  %s14 = sld [smem:[#allocation0]]
  $region82: #{tpu_custom_call.1} parent=0
    _
  %s16 = ssub.s32 1, %s14
  %s17 = scalar_select 0, %s16, %s14
  $region1: #{tpu_custom_call.1} parent=0
    #allocation2 [shape = 'u8[4096]{0}', space=vmem, size = 0x1000, scoped, tag = 'input window, operand 0, single buffered']
    #allocation3 [shape = 's32[1]{0}', space=sflag, size = 0x4, scoped, tag = 'scoped memory for tpu_custom_call.1']
    #allocation4 [shape = 's32[1]{0}', space=sflag, size = 0x4, scoped, tag = 'scoped memory for tpu_custom_call.1']
    #allocation5 [shape = 'u8[4096]{0}', space=vmem, size = 0x1000, scoped, tag = 'input window, operand 1, single buffered']
    #allocation6 [shape = 's32[1]{0}', space=sflag, size = 0x4, scoped, tag = 'scoped memory for tpu_custom_call.1']
    #allocation7 [shape = 'u8[32768]{0}', space=vmem, size = 0x8000, scoped, tag = 'input window, operand 3, single buffered']
    #allocation8 [shape = 'u8[32768]{0}', space=vmem, size = 0x8000, scoped, tag = 'input window, operand 5, single buffered']
    #allocation9 [shape = 's32[1]{0}', space=sflag, size = 0x4, scoped, tag = 'scoped memory for tpu_custom_call.1']
    #allocation10 [shape = 'u8[32768]{0}', space=vmem, size = 0x8000, scoped, tag = 'input window, operand 9, single buffered']
    #allocation11 [shape = 'u8[4096]{0}', space=vmem, size = 0x1000, scoped, tag = 'output window, operand 0, single buffered']
    #allocation12 [shape = 'u8[4096]{0}', space=vmem, size = 0x1000, scoped, tag = 'output window, operand 1, single buffered']
    #allocation13 [shape = 's32[1]{0}', space=sflag, size = 0x4, scoped, tag = 'scoped memory for tpu_custom_call.1']
    %18 = vsyncpa [#allocation3], 0
    %19 = vsyncpa [#allocation6], 0
    %20 = vsyncpa [#allocation9], 0
    %21 = vsyncpa [#allocation4], 0
    %22 = vsyncpa [#allocation13], 0
    // Predicated region
    $region2: #{tpu_custom_call.1} parent=1 // pred_check
      _
    $region3: #{tpu_custom_call.1} parent=1 // pred_check_branch
      %24 = sbr.rel (0) target = $region5
    $region4: #{tpu_custom_call.1} parent=1 // pred_region
      %s26 = ssub.s32 128, 128
      %27 = vsyncadd [#allocation3], %s26
      %s28 = sshll.u32 [#allocation2], 4
      %s29 = int_to_ptr.vmem [resolvable:$true] %s28
      %34 = dma.hbm_to_vmem [thread:$0]  %s0, 128, %s29, [#allocation3], 64, 64, 4
    $region5: #{tpu_custom_call.1} parent=1 // pred_fallthru
      _
    // Predicated region
    $region6: #{tpu_custom_call.1} parent=1 // pred_check
      _
    $region7: #{tpu_custom_call.1} parent=1 // pred_check_branch
      %36 = sbr.rel (0) target = $region9
    $region8: #{tpu_custom_call.1} parent=1 // pred_region
      %s38 = ssub.s32 128, 128
      %39 = vsyncadd [#allocation6], %s38
      %s40 = sshll.u32 [#allocation5], 4
      %s41 = int_to_ptr.vmem [resolvable:$true] %s40
      %46 = dma.hbm_to_vmem [thread:$0]  %s1, 128, %s41, [#allocation6], 64, 64, 4
    $region9: #{tpu_custom_call.1} parent=1 // pred_fallthru
      _
    // Predicated region
    $region10: #{tpu_custom_call.1} parent=1 // pred_check
      _
    $region11: #{tpu_custom_call.1} parent=1 // pred_check_branch
      %48 = sbr.rel (0) target = $region13
    $region12: #{tpu_custom_call.1} parent=1 // pred_region
      _
    $region13: #{tpu_custom_call.1} parent=1 // pred_fallthru
      _
    // Predicated region
    $region14: #{tpu_custom_call.1} parent=1 // pred_check
      _
    $region15: #{tpu_custom_call.1} parent=1 // pred_check_branch
      %50 = sbr.rel (0) target = $region17
    $region16: #{tpu_custom_call.1} parent=1 // pred_region
      %s52 = ssub.s32 1024, 1024
      %53 = vsyncadd [#allocation6], %s52
      %s54 = sshll.u32 [#allocation7], 4
      %s55 = int_to_ptr.vmem [resolvable:$true] %s54
      %60 = dma.hbm_to_vmem [thread:$0]  %s3, 1024, %s55, [#allocation6], 64, 64, 4
    $region17: #{tpu_custom_call.1} parent=1 // pred_fallthru
      _
    // Predicated region
    $region18: #{tpu_custom_call.1} parent=1 // pred_check
      _
    $region19: #{tpu_custom_call.1} parent=1 // pred_check_branch
      %62 = sbr.rel (0) target = $region21
    $region20: #{tpu_custom_call.1} parent=1 // pred_region
      _
    $region21: #{tpu_custom_call.1} parent=1 // pred_fallthru
      _
    // Predicated region
    $region22: #{tpu_custom_call.1} parent=1 // pred_check
      _
    $region23: #{tpu_custom_call.1} parent=1 // pred_check_branch
      %64 = sbr.rel (0) target = $region25
    $region24: #{tpu_custom_call.1} parent=1 // pred_region
      %s66 = ssub.s32 1024, 1024
      %67 = vsyncadd [#allocation9], %s66
      %s68 = sshll.u32 [#allocation8], 4
      %s69 = int_to_ptr.vmem [resolvable:$true] %s68
      %74 = dma.hbm_to_vmem [thread:$0]  %s5, 1024, %s69, [#allocation9], 64, 64, 4
    $region25: #{tpu_custom_call.1} parent=1 // pred_fallthru
      _
    // Predicated region
    $region26: #{tpu_custom_call.1} parent=1 // pred_check
      _
    $region27: #{tpu_custom_call.1} parent=1 // pred_check_branch
      %76 = sbr.rel (0) target = $region29
    $region28: #{tpu_custom_call.1} parent=1 // pred_region
      _
    $region29: #{tpu_custom_call.1} parent=1 // pred_fallthru
      _
    // Predicated region
    $region30: #{tpu_custom_call.1} parent=1 // pred_check
      _
    $region31: #{tpu_custom_call.1} parent=1 // pred_check_branch
      %78 = sbr.rel (0) target = $region33
    $region32: #{tpu_custom_call.1} parent=1 // pred_region
      _
    $region33: #{tpu_custom_call.1} parent=1 // pred_fallthru
      _
    // Predicated region
    $region34: #{tpu_custom_call.1} parent=1 // pred_check
      _
    $region35: #{tpu_custom_call.1} parent=1 // pred_check_branch
      %80 = sbr.rel (0) target = $region37
    $region36: #{tpu_custom_call.1} parent=1 // pred_region
      _
    $region37: #{tpu_custom_call.1} parent=1 // pred_fallthru
      _
    // Predicated region
    $region38: #{tpu_custom_call.1} parent=1 // pred_check
      _
    $region39: #{tpu_custom_call.1} parent=1 // pred_check_branch
      %82 = sbr.rel (0) target = $region41
    $region40: #{tpu_custom_call.1} parent=1 // pred_region
      %s84 = ssub.s32 1024, 1024
      %85 = vsyncadd [#allocation9], %s84
      %s86 = sshll.u32 [#allocation10], 4
      %s87 = int_to_ptr.vmem [resolvable:$true] %s86
      %92 = dma.hbm_to_vmem [thread:$0]  %s9, 1024, %s87, [#allocation9], 64, 64, 4
    $region41: #{tpu_custom_call.1} parent=1 // pred_fallthru
      _
    // Predicated region
    $region42: #{tpu_custom_call.1} parent=1 // pred_check
      _
    $region43: #{tpu_custom_call.1} parent=1 // pred_check_branch
      %94 = sbr.rel (0) target = $region45
    $region44: #{tpu_custom_call.1} parent=1 // pred_region
      _
    $region45: #{tpu_custom_call.1} parent=1 // pred_fallthru
      _
    // Predicated region
    $region46: #{tpu_custom_call.1} parent=1 // pred_check
      _
    $region47: #{tpu_custom_call.1} parent=1 // pred_check_branch
      %96 = sbr.rel (0) target = $region49
    $region48: #{tpu_custom_call.1} parent=1 // pred_region
      %97 = dma.done [#allocation3], 128
    $region49: #{tpu_custom_call.1} parent=1 // pred_fallthru
      _
    // Predicated region
    $region50: #{tpu_custom_call.1} parent=1 // pred_check
      _
    $region51: #{tpu_custom_call.1} parent=1 // pred_check_branch
      %99 = sbr.rel (0) target = $region53
    $region52: #{tpu_custom_call.1} parent=1 // pred_region
      %100 = dma.done [#allocation6], 128
    $region53: #{tpu_custom_call.1} parent=1 // pred_fallthru
      _
    // Predicated region
    $region54: #{tpu_custom_call.1} parent=1 // pred_check
      _
    $region55: #{tpu_custom_call.1} parent=1 // pred_check_branch
      %102 = sbr.rel (0) target = $region57
    $region56: #{tpu_custom_call.1} parent=1 // pred_region
      %103 = dma.done [#allocation6], 1024
    $region57: #{tpu_custom_call.1} parent=1 // pred_fallthru
      _
    // Predicated region
    $region58: #{tpu_custom_call.1} parent=1 // pred_check
      _
    $region59: #{tpu_custom_call.1} parent=1 // pred_check_branch
      %105 = sbr.rel (0) target = $region61
    $region60: #{tpu_custom_call.1} parent=1 // pred_region
      %106 = dma.done [#allocation9], 1024
    $region61: #{tpu_custom_call.1} parent=1 // pred_fallthru
      _
    // Predicated region
    $region62: #{tpu_custom_call.1} parent=1 // pred_check
      _
    $region63: #{tpu_custom_call.1} parent=1 // pred_check_branch
      %108 = sbr.rel (0) target = $region65
    $region64: #{tpu_custom_call.1} parent=1 // pred_region
      %109 = dma.done [#allocation9], 1024
    $region65: #{tpu_custom_call.1} parent=1 // pred_fallthru
      _
    %v111 = vld [vmem:[#allocation2] sm:$0xf]
    %v112 = vld [vmem:[#allocation2 + $0x4] sm:$0xf]
    %v113 = vld [vmem:[#allocation5] sm:$0xf]
    %v114 = vld [vmem:[#allocation5 + $0x4] sm:$0xf]
    %v115 = vld [vmem:[%s2] sm:$0x1]
    %v117 = vlaneseq
    %v118 = vshrl.u32 %v117, 7
    %v119 = vsub.s32 0, %v118
    %v120 = vrot.slane %v115, %v119
    %v124 = vunpack.c.l.b16 %v111
    %v125 = vunpack.c.l.b16 %v112
    %v126 = vpack.c.b16 %v125, %v124
    %v129 = vunpack.c.l.b16 %v113
    %v130 = vunpack.c.l.b16 %v114
    %v131 = vpack.c.b16 %v130, %v129
    %vm133 = vcmask 130048
    %v135 = vsel %vm133, %v126, 0
    %137 = vmatprep.subr.bf16.mxu0 0
    %138 = vmatpush1.bf16.msra.mxu0 %v131
    %139 = vmatprep.subr.bf16.mxu0 0
    %140 = vmatpush1.bf16.msra.mxu0 0
    %141 = vmatprep.subr.bf16.mxu0 0
    %142 = vmatpush1.bf16.msra.mxu0 0
    %143 = vmatprep.subr.bf16.mxu0 0
    %144 = vmatpush1.bf16.msra.mxu0 0
    %145 = vmatprep.subr.bf16.mxu0 0
    %146 = vmatpush1.bf16.msra.mxu0 0
    %147 = vmatprep.subr.bf16.mxu0 0
    %148 = vmatpush1.bf16.msra.mxu0 0
    %149 = vmatprep.subr.bf16.mxu0 0
    %150 = vmatpush1.bf16.msra.mxu0 0
    %151 = vmatprep.subr.bf16.mxu0 0
    %152 = vmatpush1.bf16.msra.mxu0 0
    %153 = vmatprep.subr.bf16.mxu0 0
    %154 = vmatpush1.bf16.msra.mxu0 0
    %155 = vmatprep.subr.bf16.mxu0 0
    %156 = vmatpush1.bf16.msra.mxu0 0
    %157 = vmatprep.subr.bf16.mxu0 0
    %158 = vmatpush1.bf16.msra.mxu0 0
    %159 = vmatprep.subr.bf16.mxu0 0
    %160 = vmatpush1.bf16.msra.mxu0 0
    %161 = vmatprep.subr.bf16.mxu0 0
    %162 = vmatpush1.bf16.msra.mxu0 0
    %163 = vmatprep.subr.bf16.mxu0 0
    %164 = vmatpush1.bf16.msra.mxu0 0
    %165 = vmatprep.subr.bf16.mxu0 0
    %166 = vmatpush1.bf16.msra.mxu0 0
    %167 = vmatprep.subr.bf16.mxu0 0
    %168 = vmatpush1.bf16.msra.mxu0 0
    %169 = vmatprep.mubr.bf16.mxu0 0
    %170 = vmatmul.mubr.bf16.gmra.mrb[0].mxu0 %v135
    %v171 = vpop.f32.mrb[0].mxu0
    %v172 = vadd.f32 %v120, %v171
    %v173 = vpop.f32.mrb[0].mxu0
    %v174 = vpop.f32.mrb[0].mxu0
    %v175 = vadd.f32 %v120, %v174
    %v176 = vpop.f32.mrb[0].mxu0
    %177 = vdwg.mxu0
    %v178 = vmax.f32 %v172, 0.0
    %v179 = vmax.f32 %v175, 0.0
    %v180 = vpack.c.bf16 %v179, %v178
    %v181 = vld [vmem:[#allocation7] sm:$0xf]
    %v182 = vld [vmem:[#allocation7 + $0x4] sm:$0xf]
    %v183 = vld [vmem:[#allocation7 + $0x8] sm:$0xf]
    %v184 = vld [vmem:[#allocation7 + $0xc] sm:$0xf]
    %v185 = vld [vmem:[#allocation7 + $0x10] sm:$0xf]
    %v186 = vld [vmem:[#allocation7 + $0x14] sm:$0xf]
    %v187 = vld [vmem:[#allocation7 + $0x18] sm:$0xf]
    %v188 = vld [vmem:[#allocation7 + $0x1c] sm:$0xf]
    %v189 = vld [vmem:[#allocation7 + $0x20] sm:$0xf]
    %v190 = vld [vmem:[#allocation7 + $0x24] sm:$0xf]
    %v191 = vld [vmem:[#allocation7 + $0x28] sm:$0xf]
    %v192 = vld [vmem:[#allocation7 + $0x2c] sm:$0xf]
    %v193 = vld [vmem:[#allocation7 + $0x30] sm:$0xf]
    %v194 = vld [vmem:[#allocation7 + $0x34] sm:$0xf]
    %v195 = vld [vmem:[#allocation7 + $0x38] sm:$0xf]
    %v196 = vld [vmem:[#allocation7 + $0x3c] sm:$0xf]
    %v197 = vld [vmem:[%s4] sm:$0x1]
    %v199 = vlaneseq
    %v200 = vshrl.u32 %v199, 7
    %v201 = vsub.s32 0, %v200
    %v202 = vrot.slane %v197, %v201
    %v220 = vunpack.c.l.b16 %v181
    %v221 = vunpack.c.l.b16 %v182
    %v222 = vunpack.c.l.b16 %v183
    %v223 = vunpack.c.l.b16 %v184
    %v224 = vunpack.c.l.b16 %v185
    %v225 = vunpack.c.l.b16 %v186
    %v226 = vunpack.c.l.b16 %v187
    %v227 = vunpack.c.l.b16 %v188
    %v228 = vunpack.c.l.b16 %v189
    %v229 = vunpack.c.l.b16 %v190
    %v230 = vunpack.c.l.b16 %v191
    %v231 = vunpack.c.l.b16 %v192
    %v232 = vunpack.c.l.b16 %v193
    %v233 = vunpack.c.l.b16 %v194
    %v234 = vunpack.c.l.b16 %v195
    %v235 = vunpack.c.l.b16 %v196
    %v236 = vpack.c.b16 %v221, %v220
    %v237 = vpack.c.b16 %v223, %v222
    %v238 = vpack.c.b16 %v225, %v224
    %v239 = vpack.c.b16 %v227, %v226
    %v240 = vpack.c.b16 %v229, %v228
    %v241 = vpack.c.b16 %v231, %v230
    %v242 = vpack.c.b16 %v233, %v232
    %v243 = vpack.c.b16 %v235, %v234
    %252 = vmatprep.subr.bf16.mxu0 0
    %253 = vmatpush1.bf16.msra.mxu0 %v236
    %254 = vmatprep.subr.bf16.mxu0 0
    %255 = vmatpush1.bf16.msra.mxu0 %v237
    %256 = vmatprep.subr.bf16.mxu0 0
    %257 = vmatpush1.bf16.msra.mxu0 %v238
    %258 = vmatprep.subr.bf16.mxu0 0
    %259 = vmatpush1.bf16.msra.mxu0 %v239
    %260 = vmatprep.subr.bf16.mxu0 0
    %261 = vmatpush1.bf16.msra.mxu0 %v240
    %262 = vmatprep.subr.bf16.mxu0 0
    %263 = vmatpush1.bf16.msra.mxu0 %v241
    %264 = vmatprep.subr.bf16.mxu0 0
    %265 = vmatpush1.bf16.msra.mxu0 %v242
    %266 = vmatprep.subr.bf16.mxu0 0
    %267 = vmatpush1.bf16.msra.mxu0 %v243
    %268 = vmatprep.subr.bf16.mxu0 0
    %269 = vmatpush1.bf16.msra.mxu0 0
    %270 = vmatprep.subr.bf16.mxu0 0
    %271 = vmatpush1.bf16.msra.mxu0 0
    %272 = vmatprep.subr.bf16.mxu0 0
    %273 = vmatpush1.bf16.msra.mxu0 0
    %274 = vmatprep.subr.bf16.mxu0 0
    %275 = vmatpush1.bf16.msra.mxu0 0
    %276 = vmatprep.subr.bf16.mxu0 0
    %277 = vmatpush1.bf16.msra.mxu0 0
    %278 = vmatprep.subr.bf16.mxu0 0
    %279 = vmatpush1.bf16.msra.mxu0 0
    %280 = vmatprep.subr.bf16.mxu0 0
    %281 = vmatpush1.bf16.msra.mxu0 0
    %282 = vmatprep.subr.bf16.mxu0 0
    %283 = vmatpush1.bf16.msra.mxu0 0
    %284 = vmatprep.mubr.bf16.mxu0 0
    %285 = vmatmul.mubr.bf16.gmra.mrb[0].mxu0 %v180
    %v286 = vpop.f32.mrb[0].mxu0
    %v287 = vadd.f32 %v202, %v286
    %v288 = vpop.f32.mrb[0].mxu0
    %v289 = vpop.f32.mrb[0].mxu0
    %v290 = vadd.f32 %v202, %v289
    %v291 = vpop.f32.mrb[0].mxu0
    %292 = vdwg.mxu0
    %v293 = vmax.f32 %v287, 0.0
    %v294 = vmax.f32 %v290, 0.0
    %v295 = vpack.c.bf16 %v294, %v293
    %v296 = vld [vmem:[#allocation8] sm:$0xf]
    %v297 = vld [vmem:[#allocation8 + $0x4] sm:$0xf]
    %v298 = vld [vmem:[#allocation8 + $0x8] sm:$0xf]
    %v299 = vld [vmem:[#allocation8 + $0xc] sm:$0xf]
    %v300 = vld [vmem:[#allocation8 + $0x10] sm:$0xf]
    %v301 = vld [vmem:[#allocation8 + $0x14] sm:$0xf]
    %v302 = vld [vmem:[#allocation8 + $0x18] sm:$0xf]
    %v303 = vld [vmem:[#allocation8 + $0x1c] sm:$0xf]
    %v304 = vld [vmem:[#allocation8 + $0x20] sm:$0xf]
    %v305 = vld [vmem:[#allocation8 + $0x24] sm:$0xf]
    %v306 = vld [vmem:[#allocation8 + $0x28] sm:$0xf]
    %v307 = vld [vmem:[#allocation8 + $0x2c] sm:$0xf]
    %v308 = vld [vmem:[#allocation8 + $0x30] sm:$0xf]
    %v309 = vld [vmem:[#allocation8 + $0x34] sm:$0xf]
    %v310 = vld [vmem:[#allocation8 + $0x38] sm:$0xf]
    %v311 = vld [vmem:[#allocation8 + $0x3c] sm:$0xf]
    %v312 = vld [vmem:[%s6] sm:$0x1]
    %v314 = vlaneseq
    %v315 = vshrl.u32 %v314, 7
    %v316 = vsub.s32 0, %v315
    %v317 = vrot.slane %v312, %v316
    %v335 = vunpack.c.l.b16 %v296
    %v336 = vunpack.c.l.b16 %v297
    %v337 = vunpack.c.l.b16 %v298
    %v338 = vunpack.c.l.b16 %v299
    %v339 = vunpack.c.l.b16 %v300
    %v340 = vunpack.c.l.b16 %v301
    %v341 = vunpack.c.l.b16 %v302
    %v342 = vunpack.c.l.b16 %v303
    %v343 = vunpack.c.l.b16 %v304
    %v344 = vunpack.c.l.b16 %v305
    %v345 = vunpack.c.l.b16 %v306
    %v346 = vunpack.c.l.b16 %v307
    %v347 = vunpack.c.l.b16 %v308
    %v348 = vunpack.c.l.b16 %v309
    %v349 = vunpack.c.l.b16 %v310
    %v350 = vunpack.c.l.b16 %v311
    %v351 = vpack.c.b16 %v336, %v335
    %v352 = vpack.c.b16 %v338, %v337
    %v353 = vpack.c.b16 %v340, %v339
    %v354 = vpack.c.b16 %v342, %v341
    %v355 = vpack.c.b16 %v344, %v343
    %v356 = vpack.c.b16 %v346, %v345
    %v357 = vpack.c.b16 %v348, %v347
    %v358 = vpack.c.b16 %v350, %v349
    %367 = vmatprep.subr.bf16.mxu0 0
    %368 = vmatpush1.bf16.msra.mxu0 %v351
    %369 = vmatprep.subr.bf16.mxu0 0
    %370 = vmatpush1.bf16.msra.mxu0 %v352
    %371 = vmatprep.subr.bf16.mxu0 0
    %372 = vmatpush1.bf16.msra.mxu0 %v353
    %373 = vmatprep.subr.bf16.mxu0 0
    %374 = vmatpush1.bf16.msra.mxu0 %v354
    %375 = vmatprep.subr.bf16.mxu0 0
    %376 = vmatpush1.bf16.msra.mxu0 %v355
    %377 = vmatprep.subr.bf16.mxu0 0
    %378 = vmatpush1.bf16.msra.mxu0 %v356
    %379 = vmatprep.subr.bf16.mxu0 0
    %380 = vmatpush1.bf16.msra.mxu0 %v357
    %381 = vmatprep.subr.bf16.mxu0 0
    %382 = vmatpush1.bf16.msra.mxu0 %v358
    %383 = vmatprep.subr.bf16.mxu0 0
    %384 = vmatpush1.bf16.msra.mxu0 0
    %385 = vmatprep.subr.bf16.mxu0 0
    %386 = vmatpush1.bf16.msra.mxu0 0
    %387 = vmatprep.subr.bf16.mxu0 0
    %388 = vmatpush1.bf16.msra.mxu0 0
    %389 = vmatprep.subr.bf16.mxu0 0
    %390 = vmatpush1.bf16.msra.mxu0 0
    %391 = vmatprep.subr.bf16.mxu0 0
    %392 = vmatpush1.bf16.msra.mxu0 0
    %393 = vmatprep.subr.bf16.mxu0 0
    %394 = vmatpush1.bf16.msra.mxu0 0
    %395 = vmatprep.subr.bf16.mxu0 0
    %396 = vmatpush1.bf16.msra.mxu0 0
    %397 = vmatprep.subr.bf16.mxu0 0
    %398 = vmatpush1.bf16.msra.mxu0 0
    %399 = vmatprep.mubr.bf16.mxu0 0
    %400 = vmatmul.mubr.bf16.gmra.mrb[0].mxu0 %v295
    %v401 = vpop.f32.mrb[0].mxu0
    %v402 = vadd.f32 %v317, %v401
    %v403 = vpop.f32.mrb[0].mxu0
    %v404 = vpop.f32.mrb[0].mxu0
    %v405 = vadd.f32 %v317, %v404
    %v406 = vpop.f32.mrb[0].mxu0
    %407 = vdwg.mxu0
    %v408 = vmax.f32 %v402, 0.0
    %v409 = vmax.f32 %v405, 0.0
    %v410 = vld [vmem:[%s7] sm:$0xf]
    %v411 = vld [vmem:[%s7 + $0x4] sm:$0xf]
    %v414 = vunpack.c.l.b16 %v410
    %v415 = vunpack.c.l.b16 %v411
    %v416 = vpack.c.b16 %v415, %v414
    %418 = vmatprep.subr.bf16.mxu0 0
    %419 = vmatpush1.bf16.msra.mxu0 %v416
    %420 = vmatprep.subr.bf16.mxu0 0
    %421 = vmatpush1.bf16.msra.mxu0 0
    %422 = vmatprep.subr.bf16.mxu0 0
    %423 = vmatpush1.bf16.msra.mxu0 0
    %424 = vmatprep.subr.bf16.mxu0 0
    %425 = vmatpush1.bf16.msra.mxu0 0
    %426 = vmatprep.subr.bf16.mxu0 0
    %427 = vmatpush1.bf16.msra.mxu0 0
    %428 = vmatprep.subr.bf16.mxu0 0
    %429 = vmatpush1.bf16.msra.mxu0 0
    %430 = vmatprep.subr.bf16.mxu0 0
    %431 = vmatpush1.bf16.msra.mxu0 0
    %432 = vmatprep.subr.bf16.mxu0 0
    %433 = vmatpush1.bf16.msra.mxu0 0
    %434 = vmatprep.subr.bf16.mxu0 0
    %435 = vmatpush1.bf16.msra.mxu0 0
    %436 = vmatprep.subr.bf16.mxu0 0
    %437 = vmatpush1.bf16.msra.mxu0 0
    %438 = vmatprep.subr.bf16.mxu0 0
    %439 = vmatpush1.bf16.msra.mxu0 0
    %440 = vmatprep.subr.bf16.mxu0 0
    %441 = vmatpush1.bf16.msra.mxu0 0
    %442 = vmatprep.subr.bf16.mxu0 0
    %443 = vmatpush1.bf16.msra.mxu0 0
    %444 = vmatprep.subr.bf16.mxu0 0
    %445 = vmatpush1.bf16.msra.mxu0 0
    %446 = vmatprep.subr.bf16.mxu0 0
    %447 = vmatpush1.bf16.msra.mxu0 0
    %448 = vmatprep.subr.bf16.mxu0 0
    %449 = vmatpush1.bf16.msra.mxu0 0
    %450 = vmatprep.mubr.bf16.mxu0 0
    %451 = vmatmul.mubr.bf16.gmra.mrb[0].mxu0 %v135
    %v452 = vpop.f32.mrb[0].mxu0
    %v453 = vadd.f32 0.0, %v452
    %v454 = vpop.f32.mrb[0].mxu0
    %v455 = vpop.f32.mrb[0].mxu0
    %v456 = vadd.f32 0.0, %v455
    %v457 = vpop.f32.mrb[0].mxu0
    %458 = vdwg.mxu0
    %v459 = vadd.f32 %v408, %v453
    %v460 = vadd.f32 %v409, %v456
    %v461 = vld [vmem:[%s8] sm:$0x1]
    %v463 = vlaneseq
    %v464 = vshrl.u32 %v463, 7
    %v465 = vsub.s32 0, %v464
    %v466 = vrot.slane %v461, %v465
    %v468 = vadd.f32 %v459, %v466
    %v469 = vadd.f32 %v460, %v466
    %v470 = vpack.c.bf16 %v469, %v468
    %v472 = vunpack.c.l.b16 %v470
    %v473 = vunpack.c.h.b16 %v470
    %v474 = vpack.c.b16 %v472, %v472
    %v475 = vpack.c.b16 %v473, %v473
    %478 = vst [vmem:[#allocation11] sm:$0xf] %v474
    %479 = vst [vmem:[#allocation11 + $0x4] sm:$0xf] %v475
    %v480 = vld [vmem:[#allocation10] sm:$0xf]
    %v481 = vld [vmem:[#allocation10 + $0x4] sm:$0xf]
    %v482 = vld [vmem:[#allocation10 + $0x8] sm:$0xf]
    %v483 = vld [vmem:[#allocation10 + $0xc] sm:$0xf]
    %v484 = vld [vmem:[#allocation10 + $0x10] sm:$0xf]
    %v485 = vld [vmem:[#allocation10 + $0x14] sm:$0xf]
    %v486 = vld [vmem:[#allocation10 + $0x18] sm:$0xf]
    %v487 = vld [vmem:[#allocation10 + $0x1c] sm:$0xf]
    %v488 = vld [vmem:[#allocation10 + $0x20] sm:$0xf]
    %v489 = vld [vmem:[#allocation10 + $0x24] sm:$0xf]
    %v490 = vld [vmem:[#allocation10 + $0x28] sm:$0xf]
    %v491 = vld [vmem:[#allocation10 + $0x2c] sm:$0xf]
    %v492 = vld [vmem:[#allocation10 + $0x30] sm:$0xf]
    %v493 = vld [vmem:[#allocation10 + $0x34] sm:$0xf]
    %v494 = vld [vmem:[#allocation10 + $0x38] sm:$0xf]
    %v495 = vld [vmem:[#allocation10 + $0x3c] sm:$0xf]
    %v496 = vld [vmem:[%s10] sm:$0x1]
    %v498 = vlaneseq
    %v499 = vshrl.u32 %v498, 7
    %v500 = vsub.s32 0, %v499
    %v501 = vrot.slane %v496, %v500
    %v519 = vunpack.c.l.b16 %v480
    %v520 = vunpack.c.l.b16 %v481
    %v521 = vunpack.c.l.b16 %v482
    %v522 = vunpack.c.l.b16 %v483
    %v523 = vunpack.c.l.b16 %v484
    %v524 = vunpack.c.l.b16 %v485
    %v525 = vunpack.c.l.b16 %v486
    %v526 = vunpack.c.l.b16 %v487
    %v527 = vunpack.c.l.b16 %v488
    %v528 = vunpack.c.l.b16 %v489
    %v529 = vunpack.c.l.b16 %v490
    %v530 = vunpack.c.l.b16 %v491
    %v531 = vunpack.c.l.b16 %v492
    %v532 = vunpack.c.l.b16 %v493
    %v533 = vunpack.c.l.b16 %v494
    %v534 = vunpack.c.l.b16 %v495
    %v535 = vpack.c.b16 %v520, %v519
    %v536 = vpack.c.b16 %v522, %v521
    %v537 = vpack.c.b16 %v524, %v523
    %v538 = vpack.c.b16 %v526, %v525
    %v539 = vpack.c.b16 %v528, %v527
    %v540 = vpack.c.b16 %v530, %v529
    %v541 = vpack.c.b16 %v532, %v531
    %v542 = vpack.c.b16 %v534, %v533
    %551 = vmatprep.subr.bf16.mxu0 0
    %552 = vmatpush1.bf16.msra.mxu0 %v535
    %553 = vmatprep.subr.bf16.mxu0 0
    %554 = vmatpush1.bf16.msra.mxu0 %v536
    %555 = vmatprep.subr.bf16.mxu0 0
    %556 = vmatpush1.bf16.msra.mxu0 %v537
    %557 = vmatprep.subr.bf16.mxu0 0
    %558 = vmatpush1.bf16.msra.mxu0 %v538
    %559 = vmatprep.subr.bf16.mxu0 0
    %560 = vmatpush1.bf16.msra.mxu0 %v539
    %561 = vmatprep.subr.bf16.mxu0 0
    %562 = vmatpush1.bf16.msra.mxu0 %v540
    %563 = vmatprep.subr.bf16.mxu0 0
    %564 = vmatpush1.bf16.msra.mxu0 %v541
    %565 = vmatprep.subr.bf16.mxu0 0
    %566 = vmatpush1.bf16.msra.mxu0 %v542
    %567 = vmatprep.subr.bf16.mxu0 0
    %568 = vmatpush1.bf16.msra.mxu0 0
    %569 = vmatprep.subr.bf16.mxu0 0
    %570 = vmatpush1.bf16.msra.mxu0 0
    %571 = vmatprep.subr.bf16.mxu0 0
    %572 = vmatpush1.bf16.msra.mxu0 0
    %573 = vmatprep.subr.bf16.mxu0 0
    %574 = vmatpush1.bf16.msra.mxu0 0
    %575 = vmatprep.subr.bf16.mxu0 0
    %576 = vmatpush1.bf16.msra.mxu0 0
    %577 = vmatprep.subr.bf16.mxu0 0
    %578 = vmatpush1.bf16.msra.mxu0 0
    %579 = vmatprep.subr.bf16.mxu0 0
    %580 = vmatpush1.bf16.msra.mxu0 0
    %581 = vmatprep.subr.bf16.mxu0 0
    %582 = vmatpush1.bf16.msra.mxu0 0
    %583 = vmatprep.mubr.bf16.mxu0 0
    %584 = vmatmul.mubr.bf16.gmra.mrb[0].mxu0 %v470
    %v585 = vpop.f32.mrb[0].mxu0
    %v586 = vadd.f32 %v501, %v585
    %v587 = vpop.f32.mrb[0].mxu0
    %v588 = vpop.f32.mrb[0].mxu0
    %v589 = vadd.f32 %v501, %v588
    %v590 = vpop.f32.mrb[0].mxu0
    %591 = vdwg.mxu0
    %v592 = vpack.c.bf16 %v589, %v586
    %v594 = vunpack.c.l.b16 %v592
    %v595 = vunpack.c.h.b16 %v592
    %v596 = vpack.c.b16 %v594, %v594
    %v597 = vpack.c.b16 %v595, %v595
    %600 = vst [vmem:[#allocation12] sm:$0xf] %v596
    %601 = vst [vmem:[#allocation12 + $0x4] sm:$0xf] %v597
    // Predicated region
    $region66: #{tpu_custom_call.1} parent=1 // pred_check
      _
    $region67: #{tpu_custom_call.1} parent=1 // pred_check_branch
      %603 = sbr.rel (0) target = $region69
    $region68: #{tpu_custom_call.1} parent=1 // pred_region
      %s605 = ssub.s32 128, 128
      %606 = vsyncadd [#allocation4], %s605
      %s607 = sshll.u32 [#allocation11], 4
      %s608 = int_to_ptr.vmem [resolvable:$true] %s607
      %613 = dma.vmem_to_hbm [thread:$0]  %s608, 128, %s11, [#allocation4], 64, 64, 4
    $region69: #{tpu_custom_call.1} parent=1 // pred_fallthru
      _
    // Predicated region
    $region70: #{tpu_custom_call.1} parent=1 // pred_check
      _
    $region71: #{tpu_custom_call.1} parent=1 // pred_check_branch
      %615 = sbr.rel (0) target = $region73
    $region72: #{tpu_custom_call.1} parent=1 // pred_region
      %s617 = ssub.s32 128, 128
      %618 = vsyncadd [#allocation13], %s617
      %s619 = sshll.u32 [#allocation12], 4
      %s620 = int_to_ptr.vmem [resolvable:$true] %s619
      %625 = dma.vmem_to_hbm [thread:$0]  %s620, 128, %s12, [#allocation13], 64, 64, 4
    $region73: #{tpu_custom_call.1} parent=1 // pred_fallthru
      _
    // Predicated region
    $region74: #{tpu_custom_call.1} parent=1 // pred_check
      _
    $region75: #{tpu_custom_call.1} parent=1 // pred_check_branch
      %627 = sbr.rel (0) target = $region77
    $region76: #{tpu_custom_call.1} parent=1 // pred_region
      %628 = dma.done [#allocation4], 128
    $region77: #{tpu_custom_call.1} parent=1 // pred_fallthru
      _
    // Predicated region
    $region78: #{tpu_custom_call.1} parent=1 // pred_check
      _
    $region79: #{tpu_custom_call.1} parent=1 // pred_check_branch
      %630 = sbr.rel (0) target = $region81
    $region80: #{tpu_custom_call.1} parent=1 // pred_region
      %631 = dma.done [#allocation13], 128
    $region81: #{tpu_custom_call.1} parent=1 // pred_fallthru
      _
    %632 = vsyncpa [#allocation3], 1
    %633 = vsyncpa [#allocation6], 1
    %634 = vsyncpa [#allocation9], 1
    %635 = vsyncpa [#allocation4], 1
    %636 = vsyncpa [#allocation13], 1

</llo_original>
